<compile_context>
chip_gen: v6e
topology: v6e:2x2x1
jax: 0.10.0
libtpu: 0.0.40
codegen_flags: <defaults>
</compile_context>

<pallas_src>
import math

import jax
import jax.numpy as jnp
from jax import lax
from jax.experimental import pallas as pl
from jax.experimental.pallas import tpu as pltpu

_MIB = 1024 * 1024


# ----------------------------------------------------------------------------
# Kernel body
# ----------------------------------------------------------------------------
def make_sabsink_kernel(TB, N, dim_in, dim_v, num_heads, mxu_dtype, key_block):
    H = num_heads
    dv = dim_v // H
    Z = H * TB
    scale = 1.0 / math.sqrt(dim_v)   # (Q_/V^0.25)(K_/V^0.25)^T = Q_ Q_^T / sqrt(dim_V)
    use_flash = key_block < N

    def kernel(x_ref, wq_ref, bq_ref, wo_ref, bo_ref, o_ref):
        # ---- fc_q over the whole (TB*N, dim_in) slab: one big MXU matmul ----
        x2 = x_ref[...].reshape(TB * N, dim_in)            # already mxu dtype
        q = jnp.dot(x2, wq_ref[...],
                    preferred_element_type=jnp.float32) + bq_ref[...]   # f32
        q3 = q.reshape(TB, N, dim_v)

        # ---- head split -> (H*TB, N, dv); mirrors torch.cat(Q.split(dv,2),0) ----
        qh = jnp.concatenate([q3[:, :, h * dv:(h + 1) * dv] for h in range(H)],
                             axis=0)                       # (Z, N, dv) f32
        qh_m = qh.astype(mxu_dtype)                        # values / keys
        qh_s = (qh * scale).astype(mxu_dtype)              # scale folded into queries

        if not use_flash:
            # dense scores: one batched matmul over Z = H*TB, scores stay f32
            s = jnp.einsum("znd,zmd->znm", qh_s, qh_m,
                           preferred_element_type=jnp.float32)
            s = s - jnp.max(s, axis=-1, keepdims=True)
            p = jnp.exp(s)
            denom = jnp.sum(p, axis=-1, keepdims=True)
            inv = pl.reciprocal(denom, approx=True)        # EUP slot
            inv = inv * (2.0 - denom * inv)                # Newton step (denom >= 1)
            av = jnp.einsum("znm,zmd->znd", (p * inv).astype(mxu_dtype), qh_m,
                            preferred_element_type=jnp.float32)
        else:
            # flash-style online softmax over key blocks: never materialize
            # the (Z, N, N) score tensor (large-N / v7x 64 MiB VMEM).
            nk = N // key_block

            def body(kt, carry):
                m, l, acc = carry
                kb = lax.dynamic_slice_in_dim(qh_m, kt * key_block, key_block,
                                              axis=1)      # (Z, TK, dv)
                s = jnp.einsum("znd,zkd->znk", qh_s, kb,
                               preferred_element_type=jnp.float32)
                m_new = jnp.maximum(m, jnp.max(s, axis=-1, keepdims=True))
                alpha = jnp.exp(m - m_new)
                p = jnp.exp(s - m_new)
                l = alpha * l + jnp.sum(p, axis=-1, keepdims=True)
                acc = alpha * acc + jnp.einsum(
                    "znk,zkd->znd", p.astype(mxu_dtype), kb,
                    preferred_element_type=jnp.float32)
                return m_new, l, acc

            m0 = jnp.full((Z, N, 1), -jnp.inf, jnp.float32)
            l0 = jnp.zeros((Z, N, 1), jnp.float32)
            a0 = jnp.zeros((Z, N, dv), jnp.float32)
            _, l, acc = lax.fori_loop(0, nk, body, (m0, l0, a0))
            inv = pl.reciprocal(l, approx=True)
            inv = inv * (2.0 - l * inv)                    # l >= 1 after full pass
            av = acc * inv

        # ---- residual + head recombine (single lane concat, no scratch) ----
        o_z = qh + av                                      # (Z, N, dv) f32
        o3 = jnp.concatenate([o_z[h * TB:(h + 1) * TB] for h in range(H)],
                             axis=-1)                      # (TB, N, dim_v)
        o2 = o3.reshape(TB * N, dim_v)

        # ---- epilogue on the whole slab: O = O + relu(fc_o(O)) ----
        y = jnp.dot(o2.astype(mxu_dtype), wo_ref[...],
                    preferred_element_type=jnp.float32) + bo_ref[...]
        out = o2 + jnp.maximum(y, 0.0)
        o_ref[...] = out.reshape(TB, N, dim_v).astype(o_ref.dtype)

    return kernel


# ----------------------------------------------------------------------------
# Generation-aware planning (TB tile, key block, VMEM budget)
# ----------------------------------------------------------------------------
def _tpu_vmem_budget_and_cores():
    """Best-effort VMEM budget (bytes) and TensorCore count for this chip."""
    vmem_cap = 64 * _MIB            # conservative default (v7x per-TensorCore)
    cores = 1
    try:
        info = pltpu.get_tpu_info()
        cap = getattr(info, "vmem_capacity_bytes", None)
        if cap:
            vmem_cap = int(cap)
        for name in ("num_tensorcores", "tensorcores_per_chip", "num_cores",
                     "cores_per_chip", "core_count"):
            val = getattr(info, name, None)
            if val:
                cores = max(1, int(val))
                break
    except Exception:   # hardware introspection only; safe conservative defaults
        pass
    vmem_cap = min(vmem_cap, 128 * _MIB)
    budget = max(vmem_cap - 16 * _MIB, 8 * _MIB)   # headroom for compiler scratch
    return budget, cores


def _plan(B, N, dim_in, dim_v, num_heads, mxu_bytes, out_bytes, budget, cores,
          single_buffer_weights):
    """Pick (TB, key_block) so the per-step working set fits the VMEM budget."""
    H = num_heads
    dv = dim_v // H

    def step_bytes(tb, tk):
        io = 2 * tb * N * dim_in * mxu_bytes + 2 * tb * N * dim_v * out_bytes
        wmult = 1 if single_buffer_weights else 2
        w = wmult * ((dim_in * dim_v + dim_v * dim_v) * mxu_bytes + 2 * dim_v * 4)
        slab = tb * N * dim_v * (3 * 4 + 3 * mxu_bytes)    # q/o/y f32 + mxu copies
        if tk >= N:
            att = tb * H * N * N * (2 * 4 + mxu_bytes)     # s + p (+ mxu copy)
        else:
            att = (tb * H * N * tk * (2 * 4 + mxu_bytes)
                   + 2 * tb * H * N * (dv + 2) * 4)        # block s/p + m,l,acc
        return io + w + slab + att

    # dense scores unless they do not fit even at TB=1 -> flash key tiling
    if step_bytes(1, N) <= budget:
        tk = N
    else:
        cands = [d for d in range(1, N + 1) if N % d == 0 and d <= 512]
        m128 = [d for d in cands if d % 128 == 0]
        tk = max(m128) if m128 else max(cands)

    divisors = [d for d in range(1, B + 1) if B % d == 0]
    fitting = [d for d in divisors if step_bytes(d, tk) <= budget] or [1]
    if cores > 1:
        # v7x: keep the parallel grid axis evenly sharded across TensorCores
        # with at least 2 steps per core for DMA/compute overlap.
        pref = [d for d in fitting if (B // d) % cores == 0 and (B // d) >= 2 * cores]
        if pref:
            return max(pref), tk
    # single-TC chips (v5e/v6e): just take the biggest tile that fits.
    return max(fitting), tk


def _buffered_spec_supported():
    """Feature check for pl.Buffered pipeline_mode (no broad runtime fallback)."""
    if not hasattr(pl, "Buffered"):
        return False
    try:
        pl.BlockSpec((8, 128), lambda i: (0, 0), pipeline_mode=pl.Buffered(1))
    except TypeError:
        return False
    return True


# ----------------------------------------------------------------------------
# pallas_call wrapper
# ----------------------------------------------------------------------------
def _build_call(TB, key_block, B, N, dim_in, dim_v, num_heads, mxu_dtype,
                mxu_bytes, out_dtype, out_bytes, vmem_limit, single_buffer_weights):
    kernel = make_sabsink_kernel(TB, N, dim_in, dim_v, num_heads, mxu_dtype, key_block)

    def resident(shape):
        idx = lambda b: (0,) * len(shape)   # noqa: E731  (resident across the grid)
        if single_buffer_weights:
            return pl.BlockSpec(shape, idx, pipeline_mode=pl.Buffered(1))
        return pl.BlockSpec(shape, idx)

    H = num_heads
    flops = B * (2 * N * dim_in * dim_v + 4 * N * N * dim_v + 2 * N * dim_v * dim_v)
    transcendentals = B * H * N * N
    bytes_accessed = (B * N * dim_in * mxu_bytes
                      + B * N * dim_v * out_bytes
                      + (dim_in * dim_v + dim_v * dim_v) * mxu_bytes
                      + 2 * dim_v * 4)

    return pl.pallas_call(
        kernel,
        out_shape=jax.ShapeDtypeStruct((B, N, dim_v), out_dtype),
        grid_spec=pltpu.PrefetchScalarGridSpec(
            num_scalar_prefetch=0,
            grid=(B // TB,),
            in_specs=[
                pl.BlockSpec((TB, N, dim_in), lambda b: (b, 0, 0)),   # X tile
                resident((dim_in, dim_v)),                            # Wq
                resident((1, dim_v)),                                 # bq (f32)
                resident((dim_v, dim_v)),                             # Wo
                resident((1, dim_v)),                                 # bo (f32)
            ],
            out_specs=pl.BlockSpec((TB, N, dim_v), lambda b: (b, 0, 0)),
        ),
        compiler_params=pltpu.CompilerParams(
            dimension_semantics=("parallel",),
            vmem_limit_bytes=int(vmem_limit),
        ),
        cost_estimate=pl.CostEstimate(
            flops=int(flops),
            transcendentals=int(transcendentals),
            bytes_accessed=int(bytes_accessed),
        ),
    )


def sabsink_forward(x, wq, bq, wo, bo, num_heads, *, block_b=None,
                    use_bf16_matmul=True):
    B, N, dim_in = x.shape
    dim_v = wq.shape[1]
    assert dim_v % num_heads == 0, "dim_V must be divisible by num_heads"
    assert wq.shape == (dim_in, dim_v) and wo.shape == (dim_v, dim_v)

    out_dtype = x.dtype
    out_bytes = jnp.asarray(x).dtype.itemsize
    mxu_dtype = jnp.bfloat16 if use_bf16_matmul else jnp.float32
    mxu_bytes = 2 if use_bf16_matmul else 4

    # Pre-cast MXU operands ONCE in the wrapper (halves weight/x HBM DMA and
    # resident weight VMEM in bf16 mode, removes per-step VPU casts).  Biases
    # and all softmax / residual math stay f32.
    x_in = x.astype(mxu_dtype)
    wq_in = wq.astype(mxu_dtype)
    wo_in = wo.astype(mxu_dtype)
    bq_in = jnp.asarray(bq, jnp.float32).reshape(1, dim_v)
    bo_in = jnp.asarray(bo, jnp.float32).reshape(1, dim_v)

    budget, cores = _tpu_vmem_budget_and_cores()
    single_buffer = _buffered_spec_supported()
    TB, key_block = _plan(B, N, dim_in, dim_v, num_heads, mxu_bytes, out_bytes,
                          budget, cores, single_buffer)
    if block_b is not None:
        TB = block_b
    assert B % TB == 0, (B, TB)

    args = (x_in, wq_in, bq_in, wo_in, bo_in)
    call = _build_call(TB, key_block, B, N, dim_in, dim_v, num_heads, mxu_dtype,
                       mxu_bytes, out_dtype, out_bytes, budget, single_buffer)
    if not single_buffer:
        return call(*args)
    try:
        return call(*args)
    except (pltpu.LoweringException, NotImplementedError, TypeError, ValueError):
        # Narrow retry: the only delta is the Buffered(1) resident-weight
        # request; genuine VMEM / runtime errors (RuntimeError etc.) propagate.
        call = _build_call(TB, key_block, B, N, dim_in, dim_v, num_heads, mxu_dtype,
                           mxu_bytes, out_dtype, out_bytes, budget,
                           single_buffer_weights=False)
        return call(*args)


# ----------------------------------------------------------------------------
# Pure-JAX reference mirroring the PyTorch forward
# ----------------------------------------------------------------------------
def sabsink_ref(x, wq, bq, wo, bo, num_heads):
    dim_v = wq.shape[1]
    q = jnp.einsum("bnd,dv->bnv", x, wq) + bq
    q_ = jnp.concatenate(jnp.split(q, num_heads, axis=2), axis=0)   # (B*H, N, dv)
    s = jnp.einsum("bnd,bmd->bnm", q_, q_) / math.sqrt(dim_v)
    a = jax.nn.softmax(s, axis=-1)                                  # pi * n (max_iter=1)
    o_ = q_ + jnp.einsum("bnm,bmd->bnd", a, q_)
    o = jnp.concatenate(jnp.split(o_, num_heads, axis=0), axis=2)   # (B, N, dim_v)
    y = jnp.einsum("bnv,vw->bnw", o, wo) + bo
    return o + jnp.maximum(y, 0.0)


if __name__ == "__main__":
    B, N, dim_in, dim_out, num_heads = 2, 8, 16, 32, 4

    key = jax.random.PRNGKey(0)
    k1, k2, k3, k4, k5 = jax.random.split(key, 5)

    x = jax.random.normal(k1, (B, N, dim_in), jnp.float32)

    # Deterministic parameter init (PyTorch nn.Linear-style uniform bounds).
    bq_bound = 1.0 / math.sqrt(dim_in)
    wq = jax.random.uniform(k2, (dim_in, dim_out), jnp.float32, -bq_bound, bq_bound)
    bq = jax.random.uniform(k3, (1, dim_out), jnp.float32, -bq_bound, bq_bound)
    bo_bound = 1.0 / math.sqrt(dim_out)
    wo = jax.random.uniform(k4, (dim_out, dim_out), jnp.float32, -bo_bound, bo_bound)
    bo = jax.random.uniform(k5, (1, dim_out), jnp.float32, -bo_bound, bo_bound)

    ref = sabsink_ref(x, wq, bq, wo, bo, num_heads)

    # Exact-math path (f32 MXU operands): tight check against the reference.
    out_f32 = jax.block_until_ready(
        sabsink_forward(x, wq, bq, wo, bo, num_heads, use_bf16_matmul=False))
    assert out_f32.shape == (B, N, dim_out), out_f32.shape
    err32 = float(jnp.max(jnp.abs(out_f32 - ref)))
    assert jnp.allclose(out_f32, ref, atol=1e-4, rtol=1e-4), err32

    # Default fast path (bf16 MXU operands, f32 accumulation / softmax).
    out_bf16 = jax.block_until_ready(
        sabsink_forward(x, wq, bq, wo, bo, num_heads))
    assert out_bf16.shape == (B, N, dim_out), out_bf16.shape
    errbf = float(jnp.max(jnp.abs(out_bf16.astype(jnp.float32) - ref)))
    assert jnp.allclose(out_bf16.astype(jnp.float32), ref, atol=5e-2, rtol=5e-2), errbf

    print("KERNEL_OK")
</pallas_src>

<mosaic_0001>
module attributes {stable_mosaic.version = 11 : i64} {
  func.func @kernel(%arg0: i32, %arg1: memref<2x8x16xf32, #tpu.memory_space<vmem>>, %arg2: memref<16x32xf32, #tpu.memory_space<vmem>>, %arg3: memref<1x32xf32, #tpu.memory_space<vmem>>, %arg4: memref<32x32xf32, #tpu.memory_space<vmem>>, %arg5: memref<1x32xf32, #tpu.memory_space<vmem>>, %arg6: memref<2x8x32xf32, #tpu.memory_space<vmem>>) attributes {dimension_semantics = [#tpu.dimension_semantics<parallel>], iteration_bounds = array<i64: 1>, scalar_prefetch = 0 : i64, scratch_operands = 0 : i64, tpu.core_type = #tpu.core_type<tc>, window_params = [{transform_indices = @transform_0, window_bounds = array<i64: 2, 8, 16>}, {pipeline_mode = #tpu.pipeline_mode<synchronous>, transform_indices = @transform_1, window_bounds = array<i64: 16, 32>}, {pipeline_mode = #tpu.pipeline_mode<synchronous>, transform_indices = @transform_2, window_bounds = array<i64: 1, 32>}, {pipeline_mode = #tpu.pipeline_mode<synchronous>, transform_indices = @transform_3, window_bounds = array<i64: 32, 32>}, {pipeline_mode = #tpu.pipeline_mode<synchronous>, transform_indices = @transform_4, window_bounds = array<i64: 1, 32>}, {transform_indices = @transform_5, window_bounds = array<i64: 2, 8, 32>}]} {
    %c0 = arith.constant 0 : index
    %c0_0 = arith.constant 0 : index
    %c0_1 = arith.constant 0 : index
    %0 = vector.load %arg1[%c0, %c0_0, %c0_1] : memref<2x8x16xf32, #tpu.memory_space<vmem>>, vector<2x8x16xf32>
    %1 = vector.shape_cast %0 : vector<2x8x16xf32> to vector<16x16xf32>
    %c0_2 = arith.constant 0 : index
    %c0_3 = arith.constant 0 : index
    %2 = vector.load %arg2[%c0_2, %c0_3] : memref<16x32xf32, #tpu.memory_space<vmem>>, vector<16x32xf32>
    %cst = arith.constant dense<0.000000e+00> : vector<16x32xf32>
    %3 = tpu.matmul %1, %2, %cst {dimension_numbers = #tpu.dot_dimension_numbers<[1], [0], [0], [1], [0, 0, 1, 1], [], []>} : vector<16x16xf32>, vector<16x32xf32>, vector<16x32xf32> -> vector<16x32xf32>
    %c0_4 = arith.constant 0 : index
    %c0_5 = arith.constant 0 : index
    %4 = vector.load %arg3[%c0_4, %c0_5] : memref<1x32xf32, #tpu.memory_space<vmem>>, vector<1x32xf32>
    %5 = vector.broadcast %4 : vector<1x32xf32> to vector<16x32xf32>
    %6 = arith.addf %3, %5 : vector<16x32xf32>
    %7 = vector.shape_cast %6 : vector<16x32xf32> to vector<2x8x32xf32>
    %8 = vector.extract_strided_slice %7 {offsets = [0, 0, 0], sizes = [2, 8, 8], strides = [1, 1, 1]} : vector<2x8x32xf32> to vector<2x8x8xf32>
    %9 = vector.extract_strided_slice %7 {offsets = [0, 0, 8], sizes = [2, 8, 8], strides = [1, 1, 1]} : vector<2x8x32xf32> to vector<2x8x8xf32>
    %10 = vector.extract_strided_slice %7 {offsets = [0, 0, 16], sizes = [2, 8, 8], strides = [1, 1, 1]} : vector<2x8x32xf32> to vector<2x8x8xf32>
    %11 = vector.extract_strided_slice %7 {offsets = [0, 0, 24], sizes = [2, 8, 8], strides = [1, 1, 1]} : vector<2x8x32xf32> to vector<2x8x8xf32>
    %12 = tpu.concatenate %8, %9, %10, %11 in 0 : vector<2x8x8xf32>, vector<2x8x8xf32>, vector<2x8x8xf32>, vector<2x8x8xf32> -> vector<8x8x8xf32>
    %cst_6 = arith.constant 0.176776692 : f32
    %13 = vector.broadcast %cst_6 : f32 to vector<8x8x8xf32>
    %14 = arith.mulf %12, %13 : vector<8x8x8xf32>
    "tpu.trace_start"() <{level = 10 : i32, message = "znd,zmd->znm"}> : () -> ()
    %cst_7 = arith.constant dense<0.000000e+00> : vector<8x8x8xf32>
    %15 = tpu.matmul %14, %12, %cst_7 {dimension_numbers = #tpu.dot_dimension_numbers<[2], [2], [1], [1], [0, 0, 0, 1, 1, 1], [0], [0]>} : vector<8x8x8xf32>, vector<8x8x8xf32>, vector<8x8x8xf32> -> vector<8x8x8xf32>
    "tpu.trace_stop"() : () -> ()
    %cst_8 = arith.constant dense<0xFF800000> : vector<8x8xf32>
    %16 = vector.multi_reduction <maximumf>, %15, %cst_8 [2] : vector<8x8x8xf32> to vector<8x8xf32>
    %17 = vector.shape_cast %16 : vector<8x8xf32> to vector<8x8x1xf32>
    %18 = vector.broadcast %17 : vector<8x8x1xf32> to vector<8x8x8xf32>
    %19 = arith.subf %15, %18 : vector<8x8x8xf32>
    %20 = math.exp %19 : vector<8x8x8xf32>
    %cst_9 = arith.constant dense<0.000000e+00> : vector<8x8xf32>
    %21 = vector.multi_reduction <add>, %20, %cst_9 [2] : vector<8x8x8xf32> to vector<8x8xf32>
    %22 = vector.shape_cast %21 : vector<8x8xf32> to vector<8x8x1xf32>
    %23 = tpu.reciprocal %22 {approx = true} : vector<8x8x1xf32> -> vector<8x8x1xf32>
    %24 = arith.mulf %22, %23 : vector<8x8x1xf32>
    %cst_10 = arith.constant 2.000000e+00 : f32
    %25 = vector.broadcast %cst_10 : f32 to vector<8x8x1xf32>
    %26 = arith.subf %25, %24 : vector<8x8x1xf32>
    %27 = arith.mulf %23, %26 : vector<8x8x1xf32>
    %28 = vector.broadcast %27 : vector<8x8x1xf32> to vector<8x8x8xf32>
    %29 = arith.mulf %20, %28 : vector<8x8x8xf32>
    "tpu.trace_start"() <{level = 10 : i32, message = "znm,zmd->znd"}> : () -> ()
    %cst_11 = arith.constant dense<0.000000e+00> : vector<8x8x8xf32>
    %30 = tpu.matmul %29, %12, %cst_11 {dimension_numbers = #tpu.dot_dimension_numbers<[2], [1], [1], [2], [0, 0, 0, 1, 1, 2], [0], [0]>} : vector<8x8x8xf32>, vector<8x8x8xf32>, vector<8x8x8xf32> -> vector<8x8x8xf32>
    "tpu.trace_stop"() : () -> ()
    %31 = arith.addf %12, %30 : vector<8x8x8xf32>
    %32 = vector.extract_strided_slice %31 {offsets = [0, 0, 0], sizes = [2, 8, 8], strides = [1, 1, 1]} : vector<8x8x8xf32> to vector<2x8x8xf32>
    %33 = vector.extract_strided_slice %31 {offsets = [2, 0, 0], sizes = [2, 8, 8], strides = [1, 1, 1]} : vector<8x8x8xf32> to vector<2x8x8xf32>
    %34 = vector.extract_strided_slice %31 {offsets = [4, 0, 0], sizes = [2, 8, 8], strides = [1, 1, 1]} : vector<8x8x8xf32> to vector<2x8x8xf32>
    %35 = vector.extract_strided_slice %31 {offsets = [6, 0, 0], sizes = [2, 8, 8], strides = [1, 1, 1]} : vector<8x8x8xf32> to vector<2x8x8xf32>
    %36 = tpu.concatenate %32, %33, %34, %35 in 2 : vector<2x8x8xf32>, vector<2x8x8xf32>, vector<2x8x8xf32>, vector<2x8x8xf32> -> vector<2x8x32xf32>
    %37 = vector.shape_cast %36 : vector<2x8x32xf32> to vector<16x32xf32>
    %c0_12 = arith.constant 0 : index
    %c0_13 = arith.constant 0 : index
    %38 = vector.load %arg4[%c0_12, %c0_13] : memref<32x32xf32, #tpu.memory_space<vmem>>, vector<32x32xf32>
    %cst_14 = arith.constant dense<0.000000e+00> : vector<16x32xf32>
    %39 = tpu.matmul %37, %38, %cst_14 {dimension_numbers = #tpu.dot_dimension_numbers<[1], [0], [0], [1], [0, 0, 1, 1], [], []>} : vector<16x32xf32>, vector<32x32xf32>, vector<16x32xf32> -> vector<16x32xf32>
    %c0_15 = arith.constant 0 : index
    %c0_16 = arith.constant 0 : index
    %40 = vector.load %arg5[%c0_15, %c0_16] : memref<1x32xf32, #tpu.memory_space<vmem>>, vector<1x32xf32>
    %41 = vector.broadcast %40 : vector<1x32xf32> to vector<16x32xf32>
    %42 = arith.addf %39, %41 : vector<16x32xf32>
    %cst_17 = arith.constant 0.000000e+00 : f32
    %43 = vector.broadcast %cst_17 : f32 to vector<16x32xf32>
    %44 = arith.maximumf %42, %43 : vector<16x32xf32>
    %45 = arith.addf %37, %44 : vector<16x32xf32>
    %46 = vector.shape_cast %45 : vector<16x32xf32> to vector<2x8x32xf32>
    %c0_18 = arith.constant 0 : index
    %c0_19 = arith.constant 0 : index
    %c0_20 = arith.constant 0 : index
    %47 = vector.load %arg6[%c0_18, %c0_19, %c0_20] : memref<2x8x32xf32, #tpu.memory_space<vmem>>, vector<2x8x32xf32>
    tpu.vector_store %arg6[%c0_18, %c0_19, %c0_20], %46 {strides = array<i32>} : memref<2x8x32xf32, #tpu.memory_space<vmem>>, vector<2x8x32xf32>,
    return
  }
  func.func @transform_0(%arg0: i32) -> (i32, i32, i32) {
    %c0_i32 = arith.constant 0 : i32
    %c0_i32_0 = arith.constant 0 : i32
    %c0_i32_1 = arith.constant 0 : i32
    return %arg0, %c0_i32, %c0_i32_0 : i32, i32, i32
  }
  func.func @transform_1(%arg0: i32) -> (i32, i32) {
    %c0_i32 = arith.constant 0 : i32
    %c0_i32_0 = arith.constant 0 : i32
    %c0_i32_1 = arith.constant 0 : i32
    return %c0_i32, %c0_i32_0 : i32, i32
  }
  func.func @transform_2(%arg0: i32) -> (i32, i32) {
    %c0_i32 = arith.constant 0 : i32
    %c0_i32_0 = arith.constant 0 : i32
    %c0_i32_1 = arith.constant 0 : i32
    return %c0_i32, %c0_i32_0 : i32, i32
  }
  func.func @transform_3(%arg0: i32) -> (i32, i32) {
    %c0_i32 = arith.constant 0 : i32
    %c0_i32_0 = arith.constant 0 : i32
    %c0_i32_1 = arith.constant 0 : i32
    return %c0_i32, %c0_i32_0 : i32, i32
  }
  func.func @transform_4(%arg0: i32) -> (i32, i32) {
    %c0_i32 = arith.constant 0 : i32
    %c0_i32_0 = arith.constant 0 : i32
    %c0_i32_1 = arith.constant 0 : i32
    return %c0_i32, %c0_i32_0 : i32, i32
  }
  func.func @transform_5(%arg0: i32) -> (i32, i32, i32) {
    %c0_i32 = arith.constant 0 : i32
    %c0_i32_0 = arith.constant 0 : i32
    %c0_i32_1 = arith.constant 0 : i32
    return %arg0, %c0_i32, %c0_i32_0 : i32, i32, i32
  }
}

</mosaic_0001>

<llo_original>
// kernel: tpu_custom_call.1
$region0: #{tpu_custom_call.1}
  #allocation0 [shape = 'u32[]', space=smem, size = 0x4, offset = 0x4, fixed_abs, tag = 'smem constant byte address 0x4 - core index']
  #allocation1 [shape = 'u32[144,128]{1,0:T(1,128)}', space=vmem, size = 0x12000, scoped, tag = 'internal scratch']
  %s0 = inlined_call_operand.hbm [shape: f32[2,8,16], index: 0, kind: input, shape index: {}]
  %s1 = inlined_call_operand.hbm [shape: f32[16,32], index: 1, kind: input, shape index: {}]
  %s2 = inlined_call_operand.vmem [shape: f32[1,32], index: 2, kind: input, shape index: {}]
  %s3 = inlined_call_operand.hbm [shape: f32[32,32], index: 3, kind: input, shape index: {}]
  %s4 = inlined_call_operand.vmem [shape: f32[1,32], index: 4, kind: input, shape index: {}]
  %s5 = inlined_call_operand.hbm [shape: f32[2,8,32], index: 5, kind: output, shape index: {}]
  %s6 = sld [smem:[#allocation0]]
  $region42: #{tpu_custom_call.1} parent=0
    _
  %s8 = ssub.s32 1, %s6
  %s9 = scalar_select 0, %s8, %s6
  $region1: #{tpu_custom_call.1} parent=0
    #allocation2 [shape = 'u8[8192]{0}', space=vmem, size = 0x2000, scoped, tag = 'input window, operand 0, single buffered']
    #allocation3 [shape = 's32[1]{0}', space=sflag, size = 0x4, scoped, tag = 'scoped memory for tpu_custom_call.1']
    #allocation4 [shape = 's32[1]{0}', space=sflag, size = 0x4, scoped, tag = 'scoped memory for tpu_custom_call.1']
    #allocation5 [shape = 'u8[8192]{0}', space=vmem, size = 0x2000, scoped, tag = 'input window, operand 1, single buffered']
    #allocation6 [shape = 's32[1]{0}', space=sflag, size = 0x4, scoped, tag = 'scoped memory for tpu_custom_call.1']
    #allocation7 [shape = 'u8[16384]{0}', space=vmem, size = 0x4000, scoped, tag = 'input window, operand 3, single buffered']
    #allocation8 [shape = 'u8[8192]{0}', space=vmem, size = 0x2000, scoped, tag = 'output window, operand 0, single buffered']
    %10 = vsyncpa [#allocation3], 0
    %11 = vsyncpa [#allocation6], 0
    %12 = vsyncpa [#allocation4], 0
    // Predicated region
    $region2: #{tpu_custom_call.1} parent=1 // pred_check
      _
    $region3: #{tpu_custom_call.1} parent=1 // pred_check_branch
      %14 = sbr.rel (0) target = $region5
    $region4: #{tpu_custom_call.1} parent=1 // pred_region
      %s16 = ssub.s32 256, 256
      %17 = vsyncadd [#allocation3], %s16
      %s18 = sshll.u32 [#allocation2], 4
      %s19 = int_to_ptr.vmem [resolvable:$true] %s18
      %24 = dma.hbm_to_vmem [thread:$0]  %s0, 256, %s19, [#allocation3], 128, 128, 8
    $region5: #{tpu_custom_call.1} parent=1 // pred_fallthru
      _
    // Predicated region
    $region6: #{tpu_custom_call.1} parent=1 // pred_check
      _
    $region7: #{tpu_custom_call.1} parent=1 // pred_check_branch
      %26 = sbr.rel (0) target = $region9
    $region8: #{tpu_custom_call.1} parent=1 // pred_region
      %s28 = ssub.s32 256, 256
      %29 = vsyncadd [#allocation6], %s28
      %s30 = sshll.u32 [#allocation5], 4
      %s31 = int_to_ptr.vmem [resolvable:$true] %s30
      %36 = dma.hbm_to_vmem [thread:$0]  %s1, 256, %s31, [#allocation6], 128, 128, 8
    $region9: #{tpu_custom_call.1} parent=1 // pred_fallthru
      _
    // Predicated region
    $region10: #{tpu_custom_call.1} parent=1 // pred_check
      _
    $region11: #{tpu_custom_call.1} parent=1 // pred_check_branch
      %38 = sbr.rel (0) target = $region13
    $region12: #{tpu_custom_call.1} parent=1 // pred_region
      _
    $region13: #{tpu_custom_call.1} parent=1 // pred_fallthru
      _
    // Predicated region
    $region14: #{tpu_custom_call.1} parent=1 // pred_check
      _
    $region15: #{tpu_custom_call.1} parent=1 // pred_check_branch
      %40 = sbr.rel (0) target = $region17
    $region16: #{tpu_custom_call.1} parent=1 // pred_region
      %s42 = ssub.s32 512, 512
      %43 = vsyncadd [#allocation6], %s42
      %s44 = sshll.u32 [#allocation7], 4
      %s45 = int_to_ptr.vmem [resolvable:$true] %s44
      %50 = dma.hbm_to_vmem [thread:$0]  %s3, 512, %s45, [#allocation6], 128, 128, 8
    $region17: #{tpu_custom_call.1} parent=1 // pred_fallthru
      _
    // Predicated region
    $region18: #{tpu_custom_call.1} parent=1 // pred_check
      _
    $region19: #{tpu_custom_call.1} parent=1 // pred_check_branch
      %52 = sbr.rel (0) target = $region21
    $region20: #{tpu_custom_call.1} parent=1 // pred_region
      _
    $region21: #{tpu_custom_call.1} parent=1 // pred_fallthru
      _
    // Predicated region
    $region22: #{tpu_custom_call.1} parent=1 // pred_check
      _
    $region23: #{tpu_custom_call.1} parent=1 // pred_check_branch
      %54 = sbr.rel (0) target = $region25
    $region24: #{tpu_custom_call.1} parent=1 // pred_region
      %55 = dma.done [#allocation3], 256
    $region25: #{tpu_custom_call.1} parent=1 // pred_fallthru
      _
    // Predicated region
    $region26: #{tpu_custom_call.1} parent=1 // pred_check
      _
    $region27: #{tpu_custom_call.1} parent=1 // pred_check_branch
      %57 = sbr.rel (0) target = $region29
    $region28: #{tpu_custom_call.1} parent=1 // pred_region
      %58 = dma.done [#allocation6], 256
    $region29: #{tpu_custom_call.1} parent=1 // pred_fallthru
      _
    // Predicated region
    $region30: #{tpu_custom_call.1} parent=1 // pred_check
      _
    $region31: #{tpu_custom_call.1} parent=1 // pred_check_branch
      %60 = sbr.rel (0) target = $region33
    $region32: #{tpu_custom_call.1} parent=1 // pred_region
      %61 = dma.done [#allocation6], 512
    $region33: #{tpu_custom_call.1} parent=1 // pred_fallthru
      _
    %v62 = vld [vmem:[#allocation2] sm:$0xff]
    %v63 = vld [vmem:[#allocation2 + $0x8] sm:$0xff]
    %v64 = vld [vmem:[#allocation5] sm:$0xff]
    %v65 = vld [vmem:[#allocation5 + $0x8] sm:$0xff]
    %v66 = vld [vmem:[%s2] sm:$0x1]
    %v68 = vlaneseq
    %v69 = vshrl.u32 %v68, 7
    %v70 = vsub.s32 0, %v69
    %v71 = vrot.slane %v66, %v70
    %vm73 = vcmask 130048
    %v75 = vsel %vm73, %v62, 0
    %v78 = vsel %vm73, %v63, 0
    %80 = vmatprep.subr.mxu0 0.0
    %81 = vmatpush1.msra.mxu0 0.0
    %82 = vmatprep.subr.mxu0 0.0
    %83 = vmatpush1.msra.mxu0 0.0
    %84 = vmatprep.subr.mxu0 0.0
    %85 = vmatpush1.msra.mxu0 0.0
    %86 = vmatprep.subr.mxu0 0.0
    %87 = vmatpush1.msra.mxu0 0.0
    %88 = vmatprep.subr.mxu0 0.0
    %89 = vmatpush1.msra.mxu0 0.0
    %90 = vmatprep.subr.mxu0 0.0
    %91 = vmatpush1.msra.mxu0 0.0
    %92 = vmatprep.subr.mxu0 0.0
    %93 = vmatpush1.msra.mxu0 0.0
    %94 = vmatprep.subr.mxu0 0.0
    %95 = vmatpush1.msra.mxu0 0.0
    %96 = vmatprep.subr.mxu0 0.0
    %97 = vmatpush1.msra.mxu0 0.0
    %98 = vmatprep.subr.mxu0 0.0
    %99 = vmatpush1.msra.mxu0 0.0
    %100 = vmatprep.subr.mxu0 0.0
    %101 = vmatpush1.msra.mxu0 0.0
    %102 = vmatprep.subr.mxu0 0.0
    %103 = vmatpush1.msra.mxu0 0.0
    %104 = vmatprep.subr.mxu0 0.0
    %105 = vmatpush1.msra.mxu0 0.0
    %106 = vmatprep.subr.mxu0 0.0
    %107 = vmatpush1.msra.mxu0 0.0
    %108 = vmatprep.subr.mxu0 0.0
    %109 = vmatpush1.msra.mxu0 %v65
    %110 = vmatprep.subr.mxu0 0.0
    %111 = vmatpush1.msra.mxu0 %v64
    %112 = vmatprep.subr.mxu0 0.0
    %113 = vmatpush2.msra.mxu0 0.0
    %114 = vmatprep.subr.mxu0 0.0
    %115 = vmatpush2.msra.mxu0 0.0
    %116 = vmatprep.subr.mxu0 0.0
    %117 = vmatpush2.msra.mxu0 0.0
    %118 = vmatprep.subr.mxu0 0.0
    %119 = vmatpush2.msra.mxu0 0.0
    %120 = vmatprep.subr.mxu0 0.0
    %121 = vmatpush2.msra.mxu0 0.0
    %122 = vmatprep.subr.mxu0 0.0
    %123 = vmatpush2.msra.mxu0 0.0
    %124 = vmatprep.subr.mxu0 0.0
    %125 = vmatpush2.msra.mxu0 0.0
    %126 = vmatprep.subr.mxu0 0.0
    %127 = vmatpush2.msra.mxu0 0.0
    %128 = vmatprep.subr.mxu0 0.0
    %129 = vmatpush2.msra.mxu0 0.0
    %130 = vmatprep.subr.mxu0 0.0
    %131 = vmatpush2.msra.mxu0 0.0
    %132 = vmatprep.subr.mxu0 0.0
    %133 = vmatpush2.msra.mxu0 0.0
    %134 = vmatprep.subr.mxu0 0.0
    %135 = vmatpush2.msra.mxu0 0.0
    %136 = vmatprep.subr.mxu0 0.0
    %137 = vmatpush2.msra.mxu0 0.0
    %138 = vmatprep.subr.mxu0 0.0
    %139 = vmatpush2.msra.mxu0 0.0
    %140 = vmatprep.subr.mxu0 0.0
    %141 = vmatpush2.msra.mxu0 0.0
    %142 = vmatprep.subr.mxu0 0.0
    %143 = vmatpush2.msra.mxu0 0.0
    %144 = vmatprep.mubr.f32.mxu0 0.0
    %145 = vmatmul.mubr.f32.gmra.mxu0 %v75
    %v146 = vpop.f32.mrf.mxu0
    %v147 = vadd.f32 %v71, %v146
    %v148 = vpop.f32.mrf.mxu0
    %149 = vmatprep.mubr.f32.mxu0 0.0
    %150 = vmatmul.mubr.f32.gmra.mxu0 %v78
    %v151 = vpop.f32.mrf.mxu0
    %v152 = vadd.f32 %v71, %v151
    %v153 = vpop.f32.mrf.mxu0
    %154 = vdwg.mxu0
    %157 = vrot.lane.b32.xlu0 %v147, 120
    %v158 = vpop.permute.xlu0 %157
    %159 = vrot.lane.b32.xlu0 %v152, 120
    %v160 = vpop.permute.xlu0 %159
    %163 = vrot.lane.b32.xlu0 %v147, 112
    %v164 = vpop.permute.xlu0 %163
    %165 = vrot.lane.b32.xlu0 %v152, 112
    %v166 = vpop.permute.xlu0 %165
    %169 = vrot.lane.b32.xlu0 %v147, 104
    %v170 = vpop.permute.xlu0 %169
    %171 = vrot.lane.b32.xlu0 %v152, 104
    %v172 = vpop.permute.xlu0 %171
    %v175 = vmul.f32 %v147, 0.17677669
    %v176 = vmul.f32 %v152, 0.17677669
    %v177 = vmul.f32 %v158, 0.17677669
    %v178 = vmul.f32 %v160, 0.17677669
    %v179 = vmul.f32 %v164, 0.17677669
    %v180 = vmul.f32 %v166, 0.17677669
    %v181 = vmul.f32 %v170, 0.17677669
    %v182 = vmul.f32 %v172, 0.17677669
    %vm183 = vcmask 64512
    %v185 = vsel %vm183, %v175, 0
    %v187 = vsel %vm183, %v147, 0
    %189 = vmatprep.subr.mxu0 0.0
    %190 = vmatpush1.xpose.msra.mxu0 0.0
    %191 = vmatprep.subr.mxu0 0.0
    %192 = vmatpush1.xpose.msra.mxu0 0.0
    %193 = vmatprep.subr.mxu0 0.0
    %194 = vmatpush1.xpose.msra.mxu0 0.0
    %195 = vmatprep.subr.mxu0 0.0
    %196 = vmatpush1.xpose.msra.mxu0 0.0
    %197 = vmatprep.subr.mxu0 0.0
    %198 = vmatpush1.xpose.msra.mxu0 0.0
    %199 = vmatprep.subr.mxu0 0.0
    %200 = vmatpush1.xpose.msra.mxu0 0.0
    %201 = vmatprep.subr.mxu0 0.0
    %202 = vmatpush1.xpose.msra.mxu0 0.0
    %203 = vmatprep.subr.mxu0 0.0
    %204 = vmatpush1.xpose.msra.mxu0 0.0
    %205 = vmatprep.subr.mxu0 0.0
    %206 = vmatpush1.xpose.msra.mxu0 0.0
    %207 = vmatprep.subr.mxu0 0.0
    %208 = vmatpush1.xpose.msra.mxu0 0.0
    %209 = vmatprep.subr.mxu0 0.0
    %210 = vmatpush1.xpose.msra.mxu0 0.0
    %211 = vmatprep.subr.mxu0 0.0
    %212 = vmatpush1.xpose.msra.mxu0 0.0
    %213 = vmatprep.subr.mxu0 0.0
    %214 = vmatpush1.xpose.msra.mxu0 0.0
    %215 = vmatprep.subr.mxu0 0.0
    %216 = vmatpush1.xpose.msra.mxu0 0.0
    %217 = vmatprep.subr.mxu0 0.0
    %218 = vmatpush1.xpose.msra.mxu0 0.0
    %219 = vmatprep.subr.mxu0 0.0
    %220 = vmatpush1.xpose.msra.mxu0 %v187
    %221 = vmatprep.subr.mxu0 0.0
    %222 = vmatpush2.xpose.msra.mxu0 0.0
    %223 = vmatprep.subr.mxu0 0.0
    %224 = vmatpush2.xpose.msra.mxu0 0.0
    %225 = vmatprep.subr.mxu0 0.0
    %226 = vmatpush2.xpose.msra.mxu0 0.0
    %227 = vmatprep.subr.mxu0 0.0
    %228 = vmatpush2.xpose.msra.mxu0 0.0
    %229 = vmatprep.subr.mxu0 0.0
    %230 = vmatpush2.xpose.msra.mxu0 0.0
    %231 = vmatprep.subr.mxu0 0.0
    %232 = vmatpush2.xpose.msra.mxu0 0.0
    %233 = vmatprep.subr.mxu0 0.0
    %234 = vmatpush2.xpose.msra.mxu0 0.0
    %235 = vmatprep.subr.mxu0 0.0
    %236 = vmatpush2.xpose.msra.mxu0 0.0
    %237 = vmatprep.subr.mxu0 0.0
    %238 = vmatpush2.xpose.msra.mxu0 0.0
    %239 = vmatprep.subr.mxu0 0.0
    %240 = vmatpush2.xpose.msra.mxu0 0.0
    %241 = vmatprep.subr.mxu0 0.0
    %242 = vmatpush2.xpose.msra.mxu0 0.0
    %243 = vmatprep.subr.mxu0 0.0
    %244 = vmatpush2.xpose.msra.mxu0 0.0
    %245 = vmatprep.subr.mxu0 0.0
    %246 = vmatpush2.xpose.msra.mxu0 0.0
    %247 = vmatprep.subr.mxu0 0.0
    %248 = vmatpush2.xpose.msra.mxu0 0.0
    %249 = vmatprep.subr.mxu0 0.0
    %250 = vmatpush2.xpose.msra.mxu0 0.0
    %251 = vmatprep.subr.mxu0 0.0
    %252 = vmatpush2.xpose.msra.mxu0 0.0
    %253 = vmatprep.mubr.f32.mxu0 0.0
    %254 = vmatmul.mubr.f32.gmra.mxu0 %v185
    %v255 = vpop.f32.mrf.mxu0
    %v256 = vadd.f32 0.0, %v255
    %v257 = vpop.f32.mrf.mxu0
    %258 = vdwg.mxu0
    %v260 = vsel %vm183, %v176, 0
    %v262 = vsel %vm183, %v152, 0
    %264 = vmatprep.subr.mxu0 0.0
    %265 = vmatpush1.xpose.msra.mxu0 0.0
    %266 = vmatprep.subr.mxu0 0.0
    %267 = vmatpush1.xpose.msra.mxu0 0.0
    %268 = vmatprep.subr.mxu0 0.0
    %269 = vmatpush1.xpose.msra.mxu0 0.0
    %270 = vmatprep.subr.mxu0 0.0
    %271 = vmatpush1.xpose.msra.mxu0 0.0
    %272 = vmatprep.subr.mxu0 0.0
    %273 = vmatpush1.xpose.msra.mxu0 0.0
    %274 = vmatprep.subr.mxu0 0.0
    %275 = vmatpush1.xpose.msra.mxu0 0.0
    %276 = vmatprep.subr.mxu0 0.0
    %277 = vmatpush1.xpose.msra.mxu0 0.0
    %278 = vmatprep.subr.mxu0 0.0
    %279 = vmatpush1.xpose.msra.mxu0 0.0
    %280 = vmatprep.subr.mxu0 0.0
    %281 = vmatpush1.xpose.msra.mxu0 0.0
    %282 = vmatprep.subr.mxu0 0.0
    %283 = vmatpush1.xpose.msra.mxu0 0.0
    %284 = vmatprep.subr.mxu0 0.0
    %285 = vmatpush1.xpose.msra.mxu0 0.0
    %286 = vmatprep.subr.mxu0 0.0
    %287 = vmatpush1.xpose.msra.mxu0 0.0
    %288 = vmatprep.subr.mxu0 0.0
    %289 = vmatpush1.xpose.msra.mxu0 0.0
    %290 = vmatprep.subr.mxu0 0.0
    %291 = vmatpush1.xpose.msra.mxu0 0.0
    %292 = vmatprep.subr.mxu0 0.0
    %293 = vmatpush1.xpose.msra.mxu0 0.0
    %294 = vmatprep.subr.mxu0 0.0
    %295 = vmatpush1.xpose.msra.mxu0 %v262
    %296 = vmatprep.subr.mxu0 0.0
    %297 = vmatpush2.xpose.msra.mxu0 0.0
    %298 = vmatprep.subr.mxu0 0.0
    %299 = vmatpush2.xpose.msra.mxu0 0.0
    %300 = vmatprep.subr.mxu0 0.0
    %301 = vmatpush2.xpose.msra.mxu0 0.0
    %302 = vmatprep.subr.mxu0 0.0
    %303 = vmatpush2.xpose.msra.mxu0 0.0
    %304 = vmatprep.subr.mxu0 0.0
    %305 = vmatpush2.xpose.msra.mxu0 0.0
    %306 = vmatprep.subr.mxu0 0.0
    %307 = vmatpush2.xpose.msra.mxu0 0.0
    %308 = vmatprep.subr.mxu0 0.0
    %309 = vmatpush2.xpose.msra.mxu0 0.0
    %310 = vmatprep.subr.mxu0 0.0
    %311 = vmatpush2.xpose.msra.mxu0 0.0
    %312 = vmatprep.subr.mxu0 0.0
    %313 = vmatpush2.xpose.msra.mxu0 0.0
    %314 = vmatprep.subr.mxu0 0.0
    %315 = vmatpush2.xpose.msra.mxu0 0.0
    %316 = vmatprep.subr.mxu0 0.0
    %317 = vmatpush2.xpose.msra.mxu0 0.0
    %318 = vmatprep.subr.mxu0 0.0
    %319 = vmatpush2.xpose.msra.mxu0 0.0
    %320 = vmatprep.subr.mxu0 0.0
    %321 = vmatpush2.xpose.msra.mxu0 0.0
    %322 = vmatprep.subr.mxu0 0.0
    %323 = vmatpush2.xpose.msra.mxu0 0.0
    %324 = vmatprep.subr.mxu0 0.0
    %325 = vmatpush2.xpose.msra.mxu0 0.0
    %326 = vmatprep.subr.mxu0 0.0
    %327 = vmatpush2.xpose.msra.mxu0 0.0
    %328 = vmatprep.mubr.f32.mxu0 0.0
    %329 = vmatmul.mubr.f32.gmra.mxu0 %v260
    %v330 = vpop.f32.mrf.mxu0
    %v331 = vadd.f32 0.0, %v330
    %v332 = vpop.f32.mrf.mxu0
    %333 = vdwg.mxu0
    %v335 = vsel %vm183, %v177, 0
    %v337 = vsel %vm183, %v158, 0
    %339 = vmatprep.subr.mxu0 0.0
    %340 = vmatpush1.xpose.msra.mxu0 0.0
    %341 = vmatprep.subr.mxu0 0.0
    %342 = vmatpush1.xpose.msra.mxu0 0.0
    %343 = vmatprep.subr.mxu0 0.0
    %344 = vmatpush1.xpose.msra.mxu0 0.0
    %345 = vmatprep.subr.mxu0 0.0
    %346 = vmatpush1.xpose.msra.mxu0 0.0
    %347 = vmatprep.subr.mxu0 0.0
    %348 = vmatpush1.xpose.msra.mxu0 0.0
    %349 = vmatprep.subr.mxu0 0.0
    %350 = vmatpush1.xpose.msra.mxu0 0.0
    %351 = vmatprep.subr.mxu0 0.0
    %352 = vmatpush1.xpose.msra.mxu0 0.0
    %353 = vmatprep.subr.mxu0 0.0
    %354 = vmatpush1.xpose.msra.mxu0 0.0
    %355 = vmatprep.subr.mxu0 0.0
    %356 = vmatpush1.xpose.msra.mxu0 0.0
    %357 = vmatprep.subr.mxu0 0.0
    %358 = vmatpush1.xpose.msra.mxu0 0.0
    %359 = vmatprep.subr.mxu0 0.0
    %360 = vmatpush1.xpose.msra.mxu0 0.0
    %361 = vmatprep.subr.mxu0 0.0
    %362 = vmatpush1.xpose.msra.mxu0 0.0
    %363 = vmatprep.subr.mxu0 0.0
    %364 = vmatpush1.xpose.msra.mxu0 0.0
    %365 = vmatprep.subr.mxu0 0.0
    %366 = vmatpush1.xpose.msra.mxu0 0.0
    %367 = vmatprep.subr.mxu0 0.0
    %368 = vmatpush1.xpose.msra.mxu0 0.0
    %369 = vmatprep.subr.mxu0 0.0
    %370 = vmatpush1.xpose.msra.mxu0 %v337
    %371 = vmatprep.subr.mxu0 0.0
    %372 = vmatpush2.xpose.msra.mxu0 0.0
    %373 = vmatprep.subr.mxu0 0.0
    %374 = vmatpush2.xpose.msra.mxu0 0.0
    %375 = vmatprep.subr.mxu0 0.0
    %376 = vmatpush2.xpose.msra.mxu0 0.0
    %377 = vmatprep.subr.mxu0 0.0
    %378 = vmatpush2.xpose.msra.mxu0 0.0
    %379 = vmatprep.subr.mxu0 0.0
    %380 = vmatpush2.xpose.msra.mxu0 0.0
    %381 = vmatprep.subr.mxu0 0.0
    %382 = vmatpush2.xpose.msra.mxu0 0.0
    %383 = vmatprep.subr.mxu0 0.0
    %384 = vmatpush2.xpose.msra.mxu0 0.0
    %385 = vmatprep.subr.mxu0 0.0
    %386 = vmatpush2.xpose.msra.mxu0 0.0
    %387 = vmatprep.subr.mxu0 0.0
    %388 = vmatpush2.xpose.msra.mxu0 0.0
    %389 = vmatprep.subr.mxu0 0.0
    %390 = vmatpush2.xpose.msra.mxu0 0.0
    %391 = vmatprep.subr.mxu0 0.0
    %392 = vmatpush2.xpose.msra.mxu0 0.0
    %393 = vmatprep.subr.mxu0 0.0
    %394 = vmatpush2.xpose.msra.mxu0 0.0
    %395 = vmatprep.subr.mxu0 0.0
    %396 = vmatpush2.xpose.msra.mxu0 0.0
    %397 = vmatprep.subr.mxu0 0.0
    %398 = vmatpush2.xpose.msra.mxu0 0.0
    %399 = vmatprep.subr.mxu0 0.0
    %400 = vmatpush2.xpose.msra.mxu0 0.0
    %401 = vmatprep.subr.mxu0 0.0
    %402 = vmatpush2.xpose.msra.mxu0 0.0
    %403 = vmatprep.mubr.f32.mxu0 0.0
    %404 = vmatmul.mubr.f32.gmra.mxu0 %v335
    %v405 = vpop.f32.mrf.mxu0
    %v406 = vadd.f32 0.0, %v405
    %v407 = vpop.f32.mrf.mxu0
    %408 = vdwg.mxu0
    %v410 = vsel %vm183, %v178, 0
    %v412 = vsel %vm183, %v160, 0
    %414 = vmatprep.subr.mxu0 0.0
    %415 = vmatpush1.xpose.msra.mxu0 0.0
    %416 = vmatprep.subr.mxu0 0.0
    %417 = vmatpush1.xpose.msra.mxu0 0.0
    %418 = vmatprep.subr.mxu0 0.0
    %419 = vmatpush1.xpose.msra.mxu0 0.0
    %420 = vmatprep.subr.mxu0 0.0
    %421 = vmatpush1.xpose.msra.mxu0 0.0
    %422 = vmatprep.subr.mxu0 0.0
    %423 = vmatpush1.xpose.msra.mxu0 0.0
    %424 = vmatprep.subr.mxu0 0.0
    %425 = vmatpush1.xpose.msra.mxu0 0.0
    %426 = vmatprep.subr.mxu0 0.0
    %427 = vmatpush1.xpose.msra.mxu0 0.0
    %428 = vmatprep.subr.mxu0 0.0
    %429 = vmatpush1.xpose.msra.mxu0 0.0
    %430 = vmatprep.subr.mxu0 0.0
    %431 = vmatpush1.xpose.msra.mxu0 0.0
    %432 = vmatprep.subr.mxu0 0.0
    %433 = vmatpush1.xpose.msra.mxu0 0.0
    %434 = vmatprep.subr.mxu0 0.0
    %435 = vmatpush1.xpose.msra.mxu0 0.0
    %436 = vmatprep.subr.mxu0 0.0
    %437 = vmatpush1.xpose.msra.mxu0 0.0
    %438 = vmatprep.subr.mxu0 0.0
    %439 = vmatpush1.xpose.msra.mxu0 0.0
    %440 = vmatprep.subr.mxu0 0.0
    %441 = vmatpush1.xpose.msra.mxu0 0.0
    %442 = vmatprep.subr.mxu0 0.0
    %443 = vmatpush1.xpose.msra.mxu0 0.0
    %444 = vmatprep.subr.mxu0 0.0
    %445 = vmatpush1.xpose.msra.mxu0 %v412
    %446 = vmatprep.subr.mxu0 0.0
    %447 = vmatpush2.xpose.msra.mxu0 0.0
    %448 = vmatprep.subr.mxu0 0.0
    %449 = vmatpush2.xpose.msra.mxu0 0.0
    %450 = vmatprep.subr.mxu0 0.0
    %451 = vmatpush2.xpose.msra.mxu0 0.0
    %452 = vmatprep.subr.mxu0 0.0
    %453 = vmatpush2.xpose.msra.mxu0 0.0
    %454 = vmatprep.subr.mxu0 0.0
    %455 = vmatpush2.xpose.msra.mxu0 0.0
    %456 = vmatprep.subr.mxu0 0.0
    %457 = vmatpush2.xpose.msra.mxu0 0.0
    %458 = vmatprep.subr.mxu0 0.0
    %459 = vmatpush2.xpose.msra.mxu0 0.0
    %460 = vmatprep.subr.mxu0 0.0
    %461 = vmatpush2.xpose.msra.mxu0 0.0
    %462 = vmatprep.subr.mxu0 0.0
    %463 = vmatpush2.xpose.msra.mxu0 0.0
    %464 = vmatprep.subr.mxu0 0.0
    %465 = vmatpush2.xpose.msra.mxu0 0.0
    %466 = vmatprep.subr.mxu0 0.0
    %467 = vmatpush2.xpose.msra.mxu0 0.0
    %468 = vmatprep.subr.mxu0 0.0
    %469 = vmatpush2.xpose.msra.mxu0 0.0
    %470 = vmatprep.subr.mxu0 0.0
    %471 = vmatpush2.xpose.msra.mxu0 0.0
    %472 = vmatprep.subr.mxu0 0.0
    %473 = vmatpush2.xpose.msra.mxu0 0.0
    %474 = vmatprep.subr.mxu0 0.0
    %475 = vmatpush2.xpose.msra.mxu0 0.0
    %476 = vmatprep.subr.mxu0 0.0
    %477 = vmatpush2.xpose.msra.mxu0 0.0
    %478 = vmatprep.mubr.f32.mxu0 0.0
    %479 = vmatmul.mubr.f32.gmra.mxu0 %v410
    %v480 = vpop.f32.mrf.mxu0
    %v481 = vadd.f32 0.0, %v480
    %v482 = vpop.f32.mrf.mxu0
    %483 = vdwg.mxu0
    %v485 = vsel %vm183, %v179, 0
    %v487 = vsel %vm183, %v164, 0
    %489 = vmatprep.subr.mxu0 0.0
    %490 = vmatpush1.xpose.msra.mxu0 0.0
    %491 = vmatprep.subr.mxu0 0.0
    %492 = vmatpush1.xpose.msra.mxu0 0.0
    %493 = vmatprep.subr.mxu0 0.0
    %494 = vmatpush1.xpose.msra.mxu0 0.0
    %495 = vmatprep.subr.mxu0 0.0
    %496 = vmatpush1.xpose.msra.mxu0 0.0
    %497 = vmatprep.subr.mxu0 0.0
    %498 = vmatpush1.xpose.msra.mxu0 0.0
    %499 = vmatprep.subr.mxu0 0.0
    %500 = vmatpush1.xpose.msra.mxu0 0.0
    %501 = vmatprep.subr.mxu0 0.0
    %502 = vmatpush1.xpose.msra.mxu0 0.0
    %503 = vmatprep.subr.mxu0 0.0
    %504 = vmatpush1.xpose.msra.mxu0 0.0
    %505 = vmatprep.subr.mxu0 0.0
    %506 = vmatpush1.xpose.msra.mxu0 0.0
    %507 = vmatprep.subr.mxu0 0.0
    %508 = vmatpush1.xpose.msra.mxu0 0.0
    %509 = vmatprep.subr.mxu0 0.0
    %510 = vmatpush1.xpose.msra.mxu0 0.0
    %511 = vmatprep.subr.mxu0 0.0
    %512 = vmatpush1.xpose.msra.mxu0 0.0
    %513 = vmatprep.subr.mxu0 0.0
    %514 = vmatpush1.xpose.msra.mxu0 0.0
    %515 = vmatprep.subr.mxu0 0.0
    %516 = vmatpush1.xpose.msra.mxu0 0.0
    %517 = vmatprep.subr.mxu0 0.0
    %518 = vmatpush1.xpose.msra.mxu0 0.0
    %519 = vmatprep.subr.mxu0 0.0
    %520 = vmatpush1.xpose.msra.mxu0 %v487
    %521 = vmatprep.subr.mxu0 0.0
    %522 = vmatpush2.xpose.msra.mxu0 0.0
    %523 = vmatprep.subr.mxu0 0.0
    %524 = vmatpush2.xpose.msra.mxu0 0.0
    %525 = vmatprep.subr.mxu0 0.0
    %526 = vmatpush2.xpose.msra.mxu0 0.0
    %527 = vmatprep.subr.mxu0 0.0
    %528 = vmatpush2.xpose.msra.mxu0 0.0
    %529 = vmatprep.subr.mxu0 0.0
    %530 = vmatpush2.xpose.msra.mxu0 0.0
    %531 = vmatprep.subr.mxu0 0.0
    %532 = vmatpush2.xpose.msra.mxu0 0.0
    %533 = vmatprep.subr.mxu0 0.0
    %534 = vmatpush2.xpose.msra.mxu0 0.0
    %535 = vmatprep.subr.mxu0 0.0
    %536 = vmatpush2.xpose.msra.mxu0 0.0
    %537 = vmatprep.subr.mxu0 0.0
    %538 = vmatpush2.xpose.msra.mxu0 0.0
    %539 = vmatprep.subr.mxu0 0.0
    %540 = vmatpush2.xpose.msra.mxu0 0.0
    %541 = vmatprep.subr.mxu0 0.0
    %542 = vmatpush2.xpose.msra.mxu0 0.0
    %543 = vmatprep.subr.mxu0 0.0
    %544 = vmatpush2.xpose.msra.mxu0 0.0
    %545 = vmatprep.subr.mxu0 0.0
    %546 = vmatpush2.xpose.msra.mxu0 0.0
    %547 = vmatprep.subr.mxu0 0.0
    %548 = vmatpush2.xpose.msra.mxu0 0.0
    %549 = vmatprep.subr.mxu0 0.0
    %550 = vmatpush2.xpose.msra.mxu0 0.0
    %551 = vmatprep.subr.mxu0 0.0
    %552 = vmatpush2.xpose.msra.mxu0 0.0
    %553 = vmatprep.mubr.f32.mxu0 0.0
    %554 = vmatmul.mubr.f32.gmra.mxu0 %v485
    %v555 = vpop.f32.mrf.mxu0
    %v556 = vadd.f32 0.0, %v555
    %v557 = vpop.f32.mrf.mxu0
    %558 = vdwg.mxu0
    %v560 = vsel %vm183, %v180, 0
    %v562 = vsel %vm183, %v166, 0
    %564 = vmatprep.subr.mxu0 0.0
    %565 = vmatpush1.xpose.msra.mxu0 0.0
    %566 = vmatprep.subr.mxu0 0.0
    %567 = vmatpush1.xpose.msra.mxu0 0.0
    %568 = vmatprep.subr.mxu0 0.0
    %569 = vmatpush1.xpose.msra.mxu0 0.0
    %570 = vmatprep.subr.mxu0 0.0
    %571 = vmatpush1.xpose.msra.mxu0 0.0
    %572 = vmatprep.subr.mxu0 0.0
    %573 = vmatpush1.xpose.msra.mxu0 0.0
    %574 = vmatprep.subr.mxu0 0.0
    %575 = vmatpush1.xpose.msra.mxu0 0.0
    %576 = vmatprep.subr.mxu0 0.0
    %577 = vmatpush1.xpose.msra.mxu0 0.0
    %578 = vmatprep.subr.mxu0 0.0
    %579 = vmatpush1.xpose.msra.mxu0 0.0
    %580 = vmatprep.subr.mxu0 0.0
    %581 = vmatpush1.xpose.msra.mxu0 0.0
    %582 = vmatprep.subr.mxu0 0.0
    %583 = vmatpush1.xpose.msra.mxu0 0.0
    %584 = vmatprep.subr.mxu0 0.0
    %585 = vmatpush1.xpose.msra.mxu0 0.0
    %586 = vmatprep.subr.mxu0 0.0
    %587 = vmatpush1.xpose.msra.mxu0 0.0
    %588 = vmatprep.subr.mxu0 0.0
    %589 = vmatpush1.xpose.msra.mxu0 0.0
    %590 = vmatprep.subr.mxu0 0.0
    %591 = vmatpush1.xpose.msra.mxu0 0.0
    %592 = vmatprep.subr.mxu0 0.0
    %593 = vmatpush1.xpose.msra.mxu0 0.0
    %594 = vmatprep.subr.mxu0 0.0
    %595 = vmatpush1.xpose.msra.mxu0 %v562
    %596 = vmatprep.subr.mxu0 0.0
    %597 = vmatpush2.xpose.msra.mxu0 0.0
    %598 = vmatprep.subr.mxu0 0.0
    %599 = vmatpush2.xpose.msra.mxu0 0.0
    %600 = vmatprep.subr.mxu0 0.0
    %601 = vmatpush2.xpose.msra.mxu0 0.0
    %602 = vmatprep.subr.mxu0 0.0
    %603 = vmatpush2.xpose.msra.mxu0 0.0
    %604 = vmatprep.subr.mxu0 0.0
    %605 = vmatpush2.xpose.msra.mxu0 0.0
    %606 = vmatprep.subr.mxu0 0.0
    %607 = vmatpush2.xpose.msra.mxu0 0.0
    %608 = vmatprep.subr.mxu0 0.0
    %609 = vmatpush2.xpose.msra.mxu0 0.0
    %610 = vmatprep.subr.mxu0 0.0
    %611 = vmatpush2.xpose.msra.mxu0 0.0
    %612 = vmatprep.subr.mxu0 0.0
    %613 = vmatpush2.xpose.msra.mxu0 0.0
    %614 = vmatprep.subr.mxu0 0.0
    %615 = vmatpush2.xpose.msra.mxu0 0.0
    %616 = vmatprep.subr.mxu0 0.0
    %617 = vmatpush2.xpose.msra.mxu0 0.0
    %618 = vmatprep.subr.mxu0 0.0
    %619 = vmatpush2.xpose.msra.mxu0 0.0
    %620 = vmatprep.subr.mxu0 0.0
    %621 = vmatpush2.xpose.msra.mxu0 0.0
    %622 = vmatprep.subr.mxu0 0.0
    %623 = vmatpush2.xpose.msra.mxu0 0.0
    %624 = vmatprep.subr.mxu0 0.0
    %625 = vmatpush2.xpose.msra.mxu0 0.0
    %626 = vmatprep.subr.mxu0 0.0
    %627 = vmatpush2.xpose.msra.mxu0 0.0
    %628 = vmatprep.mubr.f32.mxu0 0.0
    %629 = vmatmul.mubr.f32.gmra.mxu0 %v560
    %v630 = vpop.f32.mrf.mxu0
    %v631 = vadd.f32 0.0, %v630
    %v632 = vpop.f32.mrf.mxu0
    %633 = vdwg.mxu0
    %v635 = vsel %vm183, %v181, 0
    %v637 = vsel %vm183, %v170, 0
    %639 = vmatprep.subr.mxu0 0.0
    %640 = vmatpush1.xpose.msra.mxu0 0.0
    %641 = vmatprep.subr.mxu0 0.0
    %642 = vmatpush1.xpose.msra.mxu0 0.0
    %643 = vmatprep.subr.mxu0 0.0
    %644 = vmatpush1.xpose.msra.mxu0 0.0
    %645 = vmatprep.subr.mxu0 0.0
    %646 = vmatpush1.xpose.msra.mxu0 0.0
    %647 = vmatprep.subr.mxu0 0.0
    %648 = vmatpush1.xpose.msra.mxu0 0.0
    %649 = vmatprep.subr.mxu0 0.0
    %650 = vmatpush1.xpose.msra.mxu0 0.0
    %651 = vmatprep.subr.mxu0 0.0
    %652 = vmatpush1.xpose.msra.mxu0 0.0
    %653 = vmatprep.subr.mxu0 0.0
    %654 = vmatpush1.xpose.msra.mxu0 0.0
    %655 = vmatprep.subr.mxu0 0.0
    %656 = vmatpush1.xpose.msra.mxu0 0.0
    %657 = vmatprep.subr.mxu0 0.0
    %658 = vmatpush1.xpose.msra.mxu0 0.0
    %659 = vmatprep.subr.mxu0 0.0
    %660 = vmatpush1.xpose.msra.mxu0 0.0
    %661 = vmatprep.subr.mxu0 0.0
    %662 = vmatpush1.xpose.msra.mxu0 0.0
    %663 = vmatprep.subr.mxu0 0.0
    %664 = vmatpush1.xpose.msra.mxu0 0.0
    %665 = vmatprep.subr.mxu0 0.0
    %666 = vmatpush1.xpose.msra.mxu0 0.0
    %667 = vmatprep.subr.mxu0 0.0
    %668 = vmatpush1.xpose.msra.mxu0 0.0
    %669 = vmatprep.subr.mxu0 0.0
    %670 = vmatpush1.xpose.msra.mxu0 %v637
    %671 = vmatprep.subr.mxu0 0.0
    %672 = vmatpush2.xpose.msra.mxu0 0.0
    %673 = vmatprep.subr.mxu0 0.0
    %674 = vmatpush2.xpose.msra.mxu0 0.0
    %675 = vmatprep.subr.mxu0 0.0
    %676 = vmatpush2.xpose.msra.mxu0 0.0
    %677 = vmatprep.subr.mxu0 0.0
    %678 = vmatpush2.xpose.msra.mxu0 0.0
    %679 = vmatprep.subr.mxu0 0.0
    %680 = vmatpush2.xpose.msra.mxu0 0.0
    %681 = vmatprep.subr.mxu0 0.0
    %682 = vmatpush2.xpose.msra.mxu0 0.0
    %683 = vmatprep.subr.mxu0 0.0
    %684 = vmatpush2.xpose.msra.mxu0 0.0
    %685 = vmatprep.subr.mxu0 0.0
    %686 = vmatpush2.xpose.msra.mxu0 0.0
    %687 = vmatprep.subr.mxu0 0.0
    %688 = vmatpush2.xpose.msra.mxu0 0.0
    %689 = vmatprep.subr.mxu0 0.0
    %690 = vmatpush2.xpose.msra.mxu0 0.0
    %691 = vmatprep.subr.mxu0 0.0
    %692 = vmatpush2.xpose.msra.mxu0 0.0
    %693 = vmatprep.subr.mxu0 0.0
    %694 = vmatpush2.xpose.msra.mxu0 0.0
    %695 = vmatprep.subr.mxu0 0.0
    %696 = vmatpush2.xpose.msra.mxu0 0.0
    %697 = vmatprep.subr.mxu0 0.0
    %698 = vmatpush2.xpose.msra.mxu0 0.0
    %699 = vmatprep.subr.mxu0 0.0
    %700 = vmatpush2.xpose.msra.mxu0 0.0
    %701 = vmatprep.subr.mxu0 0.0
    %702 = vmatpush2.xpose.msra.mxu0 0.0
    %703 = vmatprep.mubr.f32.mxu0 0.0
    %704 = vmatmul.mubr.f32.gmra.mxu0 %v635
    %v705 = vpop.f32.mrf.mxu0
    %v706 = vadd.f32 0.0, %v705
    %v707 = vpop.f32.mrf.mxu0
    %708 = vdwg.mxu0
    %v710 = vsel %vm183, %v182, 0
    %v712 = vsel %vm183, %v172, 0
    %714 = vmatprep.subr.mxu0 0.0
    %715 = vmatpush1.xpose.msra.mxu0 0.0
    %716 = vmatprep.subr.mxu0 0.0
    %717 = vmatpush1.xpose.msra.mxu0 0.0
    %718 = vmatprep.subr.mxu0 0.0
    %719 = vmatpush1.xpose.msra.mxu0 0.0
    %720 = vmatprep.subr.mxu0 0.0
    %721 = vmatpush1.xpose.msra.mxu0 0.0
    %722 = vmatprep.subr.mxu0 0.0
    %723 = vmatpush1.xpose.msra.mxu0 0.0
    %724 = vmatprep.subr.mxu0 0.0
    %725 = vmatpush1.xpose.msra.mxu0 0.0
    %726 = vmatprep.subr.mxu0 0.0
    %727 = vmatpush1.xpose.msra.mxu0 0.0
    %728 = vmatprep.subr.mxu0 0.0
    %729 = vmatpush1.xpose.msra.mxu0 0.0
    %730 = vmatprep.subr.mxu0 0.0
    %731 = vmatpush1.xpose.msra.mxu0 0.0
    %732 = vmatprep.subr.mxu0 0.0
    %733 = vmatpush1.xpose.msra.mxu0 0.0
    %734 = vmatprep.subr.mxu0 0.0
    %735 = vmatpush1.xpose.msra.mxu0 0.0
    %736 = vmatprep.subr.mxu0 0.0
    %737 = vmatpush1.xpose.msra.mxu0 0.0
    %738 = vmatprep.subr.mxu0 0.0
    %739 = vmatpush1.xpose.msra.mxu0 0.0
    %740 = vmatprep.subr.mxu0 0.0
    %741 = vmatpush1.xpose.msra.mxu0 0.0
    %742 = vmatprep.subr.mxu0 0.0
    %743 = vmatpush1.xpose.msra.mxu0 0.0
    %744 = vmatprep.subr.mxu0 0.0
    %745 = vmatpush1.xpose.msra.mxu0 %v712
    %746 = vmatprep.subr.mxu0 0.0
    %747 = vmatpush2.xpose.msra.mxu0 0.0
    %748 = vmatprep.subr.mxu0 0.0
    %749 = vmatpush2.xpose.msra.mxu0 0.0
    %750 = vmatprep.subr.mxu0 0.0
    %751 = vmatpush2.xpose.msra.mxu0 0.0
    %752 = vmatprep.subr.mxu0 0.0
    %753 = vmatpush2.xpose.msra.mxu0 0.0
    %754 = vmatprep.subr.mxu0 0.0
    %755 = vmatpush2.xpose.msra.mxu0 0.0
    %756 = vmatprep.subr.mxu0 0.0
    %757 = vmatpush2.xpose.msra.mxu0 0.0
    %758 = vmatprep.subr.mxu0 0.0
    %759 = vmatpush2.xpose.msra.mxu0 0.0
    %760 = vmatprep.subr.mxu0 0.0
    %761 = vmatpush2.xpose.msra.mxu0 0.0
    %762 = vmatprep.subr.mxu0 0.0
    %763 = vmatpush2.xpose.msra.mxu0 0.0
    %764 = vmatprep.subr.mxu0 0.0
    %765 = vmatpush2.xpose.msra.mxu0 0.0
    %766 = vmatprep.subr.mxu0 0.0
    %767 = vmatpush2.xpose.msra.mxu0 0.0
    %768 = vmatprep.subr.mxu0 0.0
    %769 = vmatpush2.xpose.msra.mxu0 0.0
    %770 = vmatprep.subr.mxu0 0.0
    %771 = vmatpush2.xpose.msra.mxu0 0.0
    %772 = vmatprep.subr.mxu0 0.0
    %773 = vmatpush2.xpose.msra.mxu0 0.0
    %774 = vmatprep.subr.mxu0 0.0
    %775 = vmatpush2.xpose.msra.mxu0 0.0
    %776 = vmatprep.subr.mxu0 0.0
    %777 = vmatpush2.xpose.msra.mxu0 0.0
    %778 = vmatprep.mubr.f32.mxu0 0.0
    %779 = vmatmul.mubr.f32.gmra.mxu0 %v710
    %v780 = vpop.f32.mrf.mxu0
    %v781 = vadd.f32 0.0, %v780
    %v782 = vpop.f32.mrf.mxu0
    %783 = vdwg.mxu0
    %v784 = vsel %vm183, %v256, -inf
    %785 = vmax.xlane.f32.xlu0 %v784
    %v786 = vpop.xlane.xlu0 %785
    %v787 = vsel %vm183, %v331, -inf
    %788 = vmax.xlane.f32.xlu0 %v787
    %v789 = vpop.xlane.xlu0 %788
    %v790 = vsel %vm183, %v406, -inf
    %791 = vmax.xlane.f32.xlu0 %v790
    %v792 = vpop.xlane.xlu0 %791
    %v793 = vsel %vm183, %v481, -inf
    %794 = vmax.xlane.f32.xlu0 %v793
    %v795 = vpop.xlane.xlu0 %794
    %v796 = vsel %vm183, %v556, -inf
    %797 = vmax.xlane.f32.xlu0 %v796
    %v798 = vpop.xlane.xlu0 %797
    %v799 = vsel %vm183, %v631, -inf
    %800 = vmax.xlane.f32.xlu0 %v799
    %v801 = vpop.xlane.xlu0 %800
    %v802 = vsel %vm183, %v706, -inf
    %803 = vmax.xlane.f32.xlu0 %v802
    %v804 = vpop.xlane.xlu0 %803
    %v805 = vsel %vm183, %v781, -inf
    %806 = vmax.xlane.f32.xlu0 %v805
    %v807 = vpop.xlane.xlu0 %806
    %v808 = vsub.f32 %v256, %v786
    %v809 = vsub.f32 %v331, %v789
    %v810 = vsub.f32 %v406, %v792
    %v811 = vsub.f32 %v481, %v795
    %v812 = vsub.f32 %v556, %v798
    %v813 = vsub.f32 %v631, %v801
    %v814 = vsub.f32 %v706, %v804
    %v815 = vsub.f32 %v781, %v807
    %v816 = vmul.f32 %v808, 1.442695
    %v817 = vpow.pop %v816
    %v818 = vmul.f32 %v809, 1.442695
    %v819 = vpow.pop %v818
    %v820 = vmul.f32 %v810, 1.442695
    %v821 = vpow.pop %v820
    %v822 = vmul.f32 %v811, 1.442695
    %v823 = vpow.pop %v822
    %v824 = vmul.f32 %v812, 1.442695
    %v825 = vpow.pop %v824
    %v826 = vmul.f32 %v813, 1.442695
    %v827 = vpow.pop %v826
    %v828 = vmul.f32 %v814, 1.442695
    %v829 = vpow.pop %v828
    %v830 = vmul.f32 %v815, 1.442695
    %v831 = vpow.pop %v830
    %v832 = vsel %vm183, %v817, 0.0
    %833 = vadd.xlane.f32.xlu0 %v832
    %v834 = vpop.xlane.xlu0 %833
    %v835 = vsel %vm183, %v819, 0.0
    %836 = vadd.xlane.f32.xlu0 %v835
    %v837 = vpop.xlane.xlu0 %836
    %v838 = vsel %vm183, %v821, 0.0
    %839 = vadd.xlane.f32.xlu0 %v838
    %v840 = vpop.xlane.xlu0 %839
    %v841 = vsel %vm183, %v823, 0.0
    %842 = vadd.xlane.f32.xlu0 %v841
    %v843 = vpop.xlane.xlu0 %842
    %v844 = vsel %vm183, %v825, 0.0
    %845 = vadd.xlane.f32.xlu0 %v844
    %v846 = vpop.xlane.xlu0 %845
    %v847 = vsel %vm183, %v827, 0.0
    %848 = vadd.xlane.f32.xlu0 %v847
    %v849 = vpop.xlane.xlu0 %848
    %v850 = vsel %vm183, %v829, 0.0
    %851 = vadd.xlane.f32.xlu0 %v850
    %v852 = vpop.xlane.xlu0 %851
    %v853 = vsel %vm183, %v831, 0.0
    %854 = vadd.xlane.f32.xlu0 %v853
    %v855 = vpop.xlane.xlu0 %854
    %v856 = vrcp.pop %v834
    %v857 = vrcp.pop %v837
    %v858 = vrcp.pop %v840
    %v859 = vrcp.pop %v843
    %v860 = vrcp.pop %v846
    %v861 = vrcp.pop %v849
    %v862 = vrcp.pop %v852
    %v863 = vrcp.pop %v855
    %v864 = vmul.f32 %v834, %v856
    %v865 = vmul.f32 %v837, %v857
    %v866 = vmul.f32 %v840, %v858
    %v867 = vmul.f32 %v843, %v859
    %v868 = vmul.f32 %v846, %v860
    %v869 = vmul.f32 %v849, %v861
    %v870 = vmul.f32 %v852, %v862
    %v871 = vmul.f32 %v855, %v863
    %v872 = vsub.f32 2.0, %v864
    %v873 = vsub.f32 2.0, %v865
    %v874 = vsub.f32 2.0, %v866
    %v875 = vsub.f32 2.0, %v867
    %v876 = vsub.f32 2.0, %v868
    %v877 = vsub.f32 2.0, %v869
    %v878 = vsub.f32 2.0, %v870
    %v879 = vsub.f32 2.0, %v871
    %v880 = vmul.f32 %v856, %v872
    %v881 = vmul.f32 %v857, %v873
    %v882 = vmul.f32 %v858, %v874
    %v883 = vmul.f32 %v859, %v875
    %v884 = vmul.f32 %v860, %v876
    %v885 = vmul.f32 %v861, %v877
    %v886 = vmul.f32 %v862, %v878
    %v887 = vmul.f32 %v863, %v879
    %v888 = vmul.f32 %v817, %v880
    %v889 = vmul.f32 %v819, %v881
    %v890 = vmul.f32 %v821, %v882
    %v891 = vmul.f32 %v823, %v883
    %v892 = vmul.f32 %v825, %v884
    %v893 = vmul.f32 %v827, %v885
    %v894 = vmul.f32 %v829, %v886
    %v895 = vmul.f32 %v831, %v887
    %v897 = vsel %vm183, %v888, 0
    %899 = vmatprep.subr.mxu0 0.0
    %900 = vmatpush1.msra.mxu0 0.0
    %901 = vmatprep.subr.mxu0 0.0
    %902 = vmatpush1.msra.mxu0 0.0
    %903 = vmatprep.subr.mxu0 0.0
    %904 = vmatpush1.msra.mxu0 0.0
    %905 = vmatprep.subr.mxu0 0.0
    %906 = vmatpush1.msra.mxu0 0.0
    %907 = vmatprep.subr.mxu0 0.0
    %908 = vmatpush1.msra.mxu0 0.0
    %909 = vmatprep.subr.mxu0 0.0
    %910 = vmatpush1.msra.mxu0 0.0
    %911 = vmatprep.subr.mxu0 0.0
    %912 = vmatpush1.msra.mxu0 0.0
    %913 = vmatprep.subr.mxu0 0.0
    %914 = vmatpush1.msra.mxu0 0.0
    %915 = vmatprep.subr.mxu0 0.0
    %916 = vmatpush1.msra.mxu0 0.0
    %917 = vmatprep.subr.mxu0 0.0
    %918 = vmatpush1.msra.mxu0 0.0
    %919 = vmatprep.subr.mxu0 0.0
    %920 = vmatpush1.msra.mxu0 0.0
    %921 = vmatprep.subr.mxu0 0.0
    %922 = vmatpush1.msra.mxu0 0.0
    %923 = vmatprep.subr.mxu0 0.0
    %924 = vmatpush1.msra.mxu0 0.0
    %925 = vmatprep.subr.mxu0 0.0
    %926 = vmatpush1.msra.mxu0 0.0
    %927 = vmatprep.subr.mxu0 0.0
    %928 = vmatpush1.msra.mxu0 0.0
    %929 = vmatprep.subr.mxu0 0.0
    %930 = vmatpush1.msra.mxu0 %v147
    %931 = vmatprep.subr.mxu0 0.0
    %932 = vmatpush2.msra.mxu0 0.0
    %933 = vmatprep.subr.mxu0 0.0
    %934 = vmatpush2.msra.mxu0 0.0
    %935 = vmatprep.subr.mxu0 0.0
    %936 = vmatpush2.msra.mxu0 0.0
    %937 = vmatprep.subr.mxu0 0.0
    %938 = vmatpush2.msra.mxu0 0.0
    %939 = vmatprep.subr.mxu0 0.0
    %940 = vmatpush2.msra.mxu0 0.0
    %941 = vmatprep.subr.mxu0 0.0
    %942 = vmatpush2.msra.mxu0 0.0
    %943 = vmatprep.subr.mxu0 0.0
    %944 = vmatpush2.msra.mxu0 0.0
    %945 = vmatprep.subr.mxu0 0.0
    %946 = vmatpush2.msra.mxu0 0.0
    %947 = vmatprep.subr.mxu0 0.0
    %948 = vmatpush2.msra.mxu0 0.0
    %949 = vmatprep.subr.mxu0 0.0
    %950 = vmatpush2.msra.mxu0 0.0
    %951 = vmatprep.subr.mxu0 0.0
    %952 = vmatpush2.msra.mxu0 0.0
    %953 = vmatprep.subr.mxu0 0.0
    %954 = vmatpush2.msra.mxu0 0.0
    %955 = vmatprep.subr.mxu0 0.0
    %956 = vmatpush2.msra.mxu0 0.0
    %957 = vmatprep.subr.mxu0 0.0
    %958 = vmatpush2.msra.mxu0 0.0
    %959 = vmatprep.subr.mxu0 0.0
    %960 = vmatpush2.msra.mxu0 0.0
    %961 = vmatprep.subr.mxu0 0.0
    %962 = vmatpush2.msra.mxu0 0.0
    %963 = vmatprep.mubr.f32.mxu0 0.0
    %964 = vmatmul.mubr.f32.gmra.mxu0 %v897
    %v965 = vpop.f32.mrf.mxu0
    %v966 = vadd.f32 0.0, %v965
    %v967 = vpop.f32.mrf.mxu0
    %968 = vdwg.mxu0
    %v970 = vsel %vm183, %v889, 0
    %972 = vmatprep.subr.mxu0 0.0
    %973 = vmatpush1.msra.mxu0 0.0
    %974 = vmatprep.subr.mxu0 0.0
    %975 = vmatpush1.msra.mxu0 0.0
    %976 = vmatprep.subr.mxu0 0.0
    %977 = vmatpush1.msra.mxu0 0.0
    %978 = vmatprep.subr.mxu0 0.0
    %979 = vmatpush1.msra.mxu0 0.0
    %980 = vmatprep.subr.mxu0 0.0
    %981 = vmatpush1.msra.mxu0 0.0
    %982 = vmatprep.subr.mxu0 0.0
    %983 = vmatpush1.msra.mxu0 0.0
    %984 = vmatprep.subr.mxu0 0.0
    %985 = vmatpush1.msra.mxu0 0.0
    %986 = vmatprep.subr.mxu0 0.0
    %987 = vmatpush1.msra.mxu0 0.0
    %988 = vmatprep.subr.mxu0 0.0
    %989 = vmatpush1.msra.mxu0 0.0
    %990 = vmatprep.subr.mxu0 0.0
    %991 = vmatpush1.msra.mxu0 0.0
    %992 = vmatprep.subr.mxu0 0.0
    %993 = vmatpush1.msra.mxu0 0.0
    %994 = vmatprep.subr.mxu0 0.0
    %995 = vmatpush1.msra.mxu0 0.0
    %996 = vmatprep.subr.mxu0 0.0
    %997 = vmatpush1.msra.mxu0 0.0
    %998 = vmatprep.subr.mxu0 0.0
    %999 = vmatpush1.msra.mxu0 0.0
    %1000 = vmatprep.subr.mxu0 0.0
    %1001 = vmatpush1.msra.mxu0 0.0
    %1002 = vmatprep.subr.mxu0 0.0
    %1003 = vmatpush1.msra.mxu0 %v152
    %1004 = vmatprep.subr.mxu0 0.0
    %1005 = vmatpush2.msra.mxu0 0.0
    %1006 = vmatprep.subr.mxu0 0.0
    %1007 = vmatpush2.msra.mxu0 0.0
    %1008 = vmatprep.subr.mxu0 0.0
    %1009 = vmatpush2.msra.mxu0 0.0
    %1010 = vmatprep.subr.mxu0 0.0
    %1011 = vmatpush2.msra.mxu0 0.0
    %1012 = vmatprep.subr.mxu0 0.0
    %1013 = vmatpush2.msra.mxu0 0.0
    %1014 = vmatprep.subr.mxu0 0.0
    %1015 = vmatpush2.msra.mxu0 0.0
    %1016 = vmatprep.subr.mxu0 0.0
    %1017 = vmatpush2.msra.mxu0 0.0
    %1018 = vmatprep.subr.mxu0 0.0
    %1019 = vmatpush2.msra.mxu0 0.0
    %1020 = vmatprep.subr.mxu0 0.0
    %1021 = vmatpush2.msra.mxu0 0.0
    %1022 = vmatprep.subr.mxu0 0.0
    %1023 = vmatpush2.msra.mxu0 0.0
    %1024 = vmatprep.subr.mxu0 0.0
    %1025 = vmatpush2.msra.mxu0 0.0
    %1026 = vmatprep.subr.mxu0 0.0
    %1027 = vmatpush2.msra.mxu0 0.0
    %1028 = vmatprep.subr.mxu0 0.0
    %1029 = vmatpush2.msra.mxu0 0.0
    %1030 = vmatprep.subr.mxu0 0.0
    %1031 = vmatpush2.msra.mxu0 0.0
    %1032 = vmatprep.subr.mxu0 0.0
    %1033 = vmatpush2.msra.mxu0 0.0
    %1034 = vmatprep.subr.mxu0 0.0
    %1035 = vmatpush2.msra.mxu0 0.0
    %1036 = vmatprep.mubr.f32.mxu0 0.0
    %1037 = vmatmul.mubr.f32.gmra.mxu0 %v970
    %v1038 = vpop.f32.mrf.mxu0
    %v1039 = vadd.f32 0.0, %v1038
    %v1040 = vpop.f32.mrf.mxu0
    %1041 = vdwg.mxu0
    %v1043 = vsel %vm183, %v890, 0
    %1045 = vmatprep.subr.mxu0 0.0
    %1046 = vmatpush1.msra.mxu0 0.0
    %1047 = vmatprep.subr.mxu0 0.0
    %1048 = vmatpush1.msra.mxu0 0.0
    %1049 = vmatprep.subr.mxu0 0.0
    %1050 = vmatpush1.msra.mxu0 0.0
    %1051 = vmatprep.subr.mxu0 0.0
    %1052 = vmatpush1.msra.mxu0 0.0
    %1053 = vmatprep.subr.mxu0 0.0
    %1054 = vmatpush1.msra.mxu0 0.0
    %1055 = vmatprep.subr.mxu0 0.0
    %1056 = vmatpush1.msra.mxu0 0.0
    %1057 = vmatprep.subr.mxu0 0.0
    %1058 = vmatpush1.msra.mxu0 0.0
    %1059 = vmatprep.subr.mxu0 0.0
    %1060 = vmatpush1.msra.mxu0 0.0
    %1061 = vmatprep.subr.mxu0 0.0
    %1062 = vmatpush1.msra.mxu0 0.0
    %1063 = vmatprep.subr.mxu0 0.0
    %1064 = vmatpush1.msra.mxu0 0.0
    %1065 = vmatprep.subr.mxu0 0.0
    %1066 = vmatpush1.msra.mxu0 0.0
    %1067 = vmatprep.subr.mxu0 0.0
    %1068 = vmatpush1.msra.mxu0 0.0
    %1069 = vmatprep.subr.mxu0 0.0
    %1070 = vmatpush1.msra.mxu0 0.0
    %1071 = vmatprep.subr.mxu0 0.0
    %1072 = vmatpush1.msra.mxu0 0.0
    %1073 = vmatprep.subr.mxu0 0.0
    %1074 = vmatpush1.msra.mxu0 0.0
    %1075 = vmatprep.subr.mxu0 0.0
    %1076 = vmatpush1.msra.mxu0 %v158
    %1077 = vmatprep.subr.mxu0 0.0
    %1078 = vmatpush2.msra.mxu0 0.0
    %1079 = vmatprep.subr.mxu0 0.0
    %1080 = vmatpush2.msra.mxu0 0.0
    %1081 = vmatprep.subr.mxu0 0.0
    %1082 = vmatpush2.msra.mxu0 0.0
    %1083 = vmatprep.subr.mxu0 0.0
    %1084 = vmatpush2.msra.mxu0 0.0
    %1085 = vmatprep.subr.mxu0 0.0
    %1086 = vmatpush2.msra.mxu0 0.0
    %1087 = vmatprep.subr.mxu0 0.0
    %1088 = vmatpush2.msra.mxu0 0.0
    %1089 = vmatprep.subr.mxu0 0.0
    %1090 = vmatpush2.msra.mxu0 0.0
    %1091 = vmatprep.subr.mxu0 0.0
    %1092 = vmatpush2.msra.mxu0 0.0
    %1093 = vmatprep.subr.mxu0 0.0
    %1094 = vmatpush2.msra.mxu0 0.0
    %1095 = vmatprep.subr.mxu0 0.0
    %1096 = vmatpush2.msra.mxu0 0.0
    %1097 = vmatprep.subr.mxu0 0.0
    %1098 = vmatpush2.msra.mxu0 0.0
    %1099 = vmatprep.subr.mxu0 0.0
    %1100 = vmatpush2.msra.mxu0 0.0
    %1101 = vmatprep.subr.mxu0 0.0
    %1102 = vmatpush2.msra.mxu0 0.0
    %1103 = vmatprep.subr.mxu0 0.0
    %1104 = vmatpush2.msra.mxu0 0.0
    %1105 = vmatprep.subr.mxu0 0.0
    %1106 = vmatpush2.msra.mxu0 0.0
    %1107 = vmatprep.subr.mxu0 0.0
    %1108 = vmatpush2.msra.mxu0 0.0
    %1109 = vmatprep.mubr.f32.mxu0 0.0
    %1110 = vmatmul.mubr.f32.gmra.mxu0 %v1043
    %v1111 = vpop.f32.mrf.mxu0
    %v1112 = vadd.f32 0.0, %v1111
    %v1113 = vpop.f32.mrf.mxu0
    %1114 = vdwg.mxu0
    %v1116 = vsel %vm183, %v891, 0
    %1118 = vmatprep.subr.mxu0 0.0
    %1119 = vmatpush1.msra.mxu0 0.0
    %1120 = vmatprep.subr.mxu0 0.0
    %1121 = vmatpush1.msra.mxu0 0.0
    %1122 = vmatprep.subr.mxu0 0.0
    %1123 = vmatpush1.msra.mxu0 0.0
    %1124 = vmatprep.subr.mxu0 0.0
    %1125 = vmatpush1.msra.mxu0 0.0
    %1126 = vmatprep.subr.mxu0 0.0
    %1127 = vmatpush1.msra.mxu0 0.0
    %1128 = vmatprep.subr.mxu0 0.0
    %1129 = vmatpush1.msra.mxu0 0.0
    %1130 = vmatprep.subr.mxu0 0.0
    %1131 = vmatpush1.msra.mxu0 0.0
    %1132 = vmatprep.subr.mxu0 0.0
    %1133 = vmatpush1.msra.mxu0 0.0
    %1134 = vmatprep.subr.mxu0 0.0
    %1135 = vmatpush1.msra.mxu0 0.0
    %1136 = vmatprep.subr.mxu0 0.0
    %1137 = vmatpush1.msra.mxu0 0.0
    %1138 = vmatprep.subr.mxu0 0.0
    %1139 = vmatpush1.msra.mxu0 0.0
    %1140 = vmatprep.subr.mxu0 0.0
    %1141 = vmatpush1.msra.mxu0 0.0
    %1142 = vmatprep.subr.mxu0 0.0
    %1143 = vmatpush1.msra.mxu0 0.0
    %1144 = vmatprep.subr.mxu0 0.0
    %1145 = vmatpush1.msra.mxu0 0.0
    %1146 = vmatprep.subr.mxu0 0.0
    %1147 = vmatpush1.msra.mxu0 0.0
    %1148 = vmatprep.subr.mxu0 0.0
    %1149 = vmatpush1.msra.mxu0 %v160
    %1150 = vmatprep.subr.mxu0 0.0
    %1151 = vmatpush2.msra.mxu0 0.0
    %1152 = vmatprep.subr.mxu0 0.0
    %1153 = vmatpush2.msra.mxu0 0.0
    %1154 = vmatprep.subr.mxu0 0.0
    %1155 = vmatpush2.msra.mxu0 0.0
    %1156 = vmatprep.subr.mxu0 0.0
    %1157 = vmatpush2.msra.mxu0 0.0
    %1158 = vmatprep.subr.mxu0 0.0
    %1159 = vmatpush2.msra.mxu0 0.0
    %1160 = vmatprep.subr.mxu0 0.0
    %1161 = vmatpush2.msra.mxu0 0.0
    %1162 = vmatprep.subr.mxu0 0.0
    %1163 = vmatpush2.msra.mxu0 0.0
    %1164 = vmatprep.subr.mxu0 0.0
    %1165 = vmatpush2.msra.mxu0 0.0
    %1166 = vmatprep.subr.mxu0 0.0
    %1167 = vmatpush2.msra.mxu0 0.0
    %1168 = vmatprep.subr.mxu0 0.0
    %1169 = vmatpush2.msra.mxu0 0.0
    %1170 = vmatprep.subr.mxu0 0.0
    %1171 = vmatpush2.msra.mxu0 0.0
    %1172 = vmatprep.subr.mxu0 0.0
    %1173 = vmatpush2.msra.mxu0 0.0
    %1174 = vmatprep.subr.mxu0 0.0
    %1175 = vmatpush2.msra.mxu0 0.0
    %1176 = vmatprep.subr.mxu0 0.0
    %1177 = vmatpush2.msra.mxu0 0.0
    %1178 = vmatprep.subr.mxu0 0.0
    %1179 = vmatpush2.msra.mxu0 0.0
    %1180 = vmatprep.subr.mxu0 0.0
    %1181 = vmatpush2.msra.mxu0 0.0
    %1182 = vmatprep.mubr.f32.mxu0 0.0
    %1183 = vmatmul.mubr.f32.gmra.mxu0 %v1116
    %v1184 = vpop.f32.mrf.mxu0
    %v1185 = vadd.f32 0.0, %v1184
    %v1186 = vpop.f32.mrf.mxu0
    %1187 = vdwg.mxu0
    %v1189 = vsel %vm183, %v892, 0
    %1191 = vmatprep.subr.mxu0 0.0
    %1192 = vmatpush1.msra.mxu0 0.0
    %1193 = vmatprep.subr.mxu0 0.0
    %1194 = vmatpush1.msra.mxu0 0.0
    %1195 = vmatprep.subr.mxu0 0.0
    %1196 = vmatpush1.msra.mxu0 0.0
    %1197 = vmatprep.subr.mxu0 0.0
    %1198 = vmatpush1.msra.mxu0 0.0
    %1199 = vmatprep.subr.mxu0 0.0
    %1200 = vmatpush1.msra.mxu0 0.0
    %1201 = vmatprep.subr.mxu0 0.0
    %1202 = vmatpush1.msra.mxu0 0.0
    %1203 = vmatprep.subr.mxu0 0.0
    %1204 = vmatpush1.msra.mxu0 0.0
    %1205 = vmatprep.subr.mxu0 0.0
    %1206 = vmatpush1.msra.mxu0 0.0
    %1207 = vmatprep.subr.mxu0 0.0
    %1208 = vmatpush1.msra.mxu0 0.0
    %1209 = vmatprep.subr.mxu0 0.0
    %1210 = vmatpush1.msra.mxu0 0.0
    %1211 = vmatprep.subr.mxu0 0.0
    %1212 = vmatpush1.msra.mxu0 0.0
    %1213 = vmatprep.subr.mxu0 0.0
    %1214 = vmatpush1.msra.mxu0 0.0
    %1215 = vmatprep.subr.mxu0 0.0
    %1216 = vmatpush1.msra.mxu0 0.0
    %1217 = vmatprep.subr.mxu0 0.0
    %1218 = vmatpush1.msra.mxu0 0.0
    %1219 = vmatprep.subr.mxu0 0.0
    %1220 = vmatpush1.msra.mxu0 0.0
    %1221 = vmatprep.subr.mxu0 0.0
    %1222 = vmatpush1.msra.mxu0 %v164
    %1223 = vmatprep.subr.mxu0 0.0
    %1224 = vmatpush2.msra.mxu0 0.0
    %1225 = vmatprep.subr.mxu0 0.0
    %1226 = vmatpush2.msra.mxu0 0.0
    %1227 = vmatprep.subr.mxu0 0.0
    %1228 = vmatpush2.msra.mxu0 0.0
    %1229 = vmatprep.subr.mxu0 0.0
    %1230 = vmatpush2.msra.mxu0 0.0
    %1231 = vmatprep.subr.mxu0 0.0
    %1232 = vmatpush2.msra.mxu0 0.0
    %1233 = vmatprep.subr.mxu0 0.0
    %1234 = vmatpush2.msra.mxu0 0.0
    %1235 = vmatprep.subr.mxu0 0.0
    %1236 = vmatpush2.msra.mxu0 0.0
    %1237 = vmatprep.subr.mxu0 0.0
    %1238 = vmatpush2.msra.mxu0 0.0
    %1239 = vmatprep.subr.mxu0 0.0
    %1240 = vmatpush2.msra.mxu0 0.0
    %1241 = vmatprep.subr.mxu0 0.0
    %1242 = vmatpush2.msra.mxu0 0.0
    %1243 = vmatprep.subr.mxu0 0.0
    %1244 = vmatpush2.msra.mxu0 0.0
    %1245 = vmatprep.subr.mxu0 0.0
    %1246 = vmatpush2.msra.mxu0 0.0
    %1247 = vmatprep.subr.mxu0 0.0
    %1248 = vmatpush2.msra.mxu0 0.0
    %1249 = vmatprep.subr.mxu0 0.0
    %1250 = vmatpush2.msra.mxu0 0.0
    %1251 = vmatprep.subr.mxu0 0.0
    %1252 = vmatpush2.msra.mxu0 0.0
    %1253 = vmatprep.subr.mxu0 0.0
    %1254 = vmatpush2.msra.mxu0 0.0
    %1255 = vmatprep.mubr.f32.mxu0 0.0
    %1256 = vmatmul.mubr.f32.gmra.mxu0 %v1189
    %v1257 = vpop.f32.mrf.mxu0
    %v1258 = vadd.f32 0.0, %v1257
    %v1259 = vpop.f32.mrf.mxu0
    %1260 = vdwg.mxu0
    %v1262 = vsel %vm183, %v893, 0
    %1264 = vmatprep.subr.mxu0 0.0
    %1265 = vmatpush1.msra.mxu0 0.0
    %1266 = vmatprep.subr.mxu0 0.0
    %1267 = vmatpush1.msra.mxu0 0.0
    %1268 = vmatprep.subr.mxu0 0.0
    %1269 = vmatpush1.msra.mxu0 0.0
    %1270 = vmatprep.subr.mxu0 0.0
    %1271 = vmatpush1.msra.mxu0 0.0
    %1272 = vmatprep.subr.mxu0 0.0
    %1273 = vmatpush1.msra.mxu0 0.0
    %1274 = vmatprep.subr.mxu0 0.0
    %1275 = vmatpush1.msra.mxu0 0.0
    %1276 = vmatprep.subr.mxu0 0.0
    %1277 = vmatpush1.msra.mxu0 0.0
    %1278 = vmatprep.subr.mxu0 0.0
    %1279 = vmatpush1.msra.mxu0 0.0
    %1280 = vmatprep.subr.mxu0 0.0
    %1281 = vmatpush1.msra.mxu0 0.0
    %1282 = vmatprep.subr.mxu0 0.0
    %1283 = vmatpush1.msra.mxu0 0.0
    %1284 = vmatprep.subr.mxu0 0.0
    %1285 = vmatpush1.msra.mxu0 0.0
    %1286 = vmatprep.subr.mxu0 0.0
    %1287 = vmatpush1.msra.mxu0 0.0
    %1288 = vmatprep.subr.mxu0 0.0
    %1289 = vmatpush1.msra.mxu0 0.0
    %1290 = vmatprep.subr.mxu0 0.0
    %1291 = vmatpush1.msra.mxu0 0.0
    %1292 = vmatprep.subr.mxu0 0.0
    %1293 = vmatpush1.msra.mxu0 0.0
    %1294 = vmatprep.subr.mxu0 0.0
    %1295 = vmatpush1.msra.mxu0 %v166
    %1296 = vmatprep.subr.mxu0 0.0
    %1297 = vmatpush2.msra.mxu0 0.0
    %1298 = vmatprep.subr.mxu0 0.0
    %1299 = vmatpush2.msra.mxu0 0.0
    %1300 = vmatprep.subr.mxu0 0.0
    %1301 = vmatpush2.msra.mxu0 0.0
    %1302 = vmatprep.subr.mxu0 0.0
    %1303 = vmatpush2.msra.mxu0 0.0
    %1304 = vmatprep.subr.mxu0 0.0
    %1305 = vmatpush2.msra.mxu0 0.0
    %1306 = vmatprep.subr.mxu0 0.0
    %1307 = vmatpush2.msra.mxu0 0.0
    %1308 = vmatprep.subr.mxu0 0.0
    %1309 = vmatpush2.msra.mxu0 0.0
    %1310 = vmatprep.subr.mxu0 0.0
    %1311 = vmatpush2.msra.mxu0 0.0
    %1312 = vmatprep.subr.mxu0 0.0
    %1313 = vmatpush2.msra.mxu0 0.0
    %1314 = vmatprep.subr.mxu0 0.0
    %1315 = vmatpush2.msra.mxu0 0.0
    %1316 = vmatprep.subr.mxu0 0.0
    %1317 = vmatpush2.msra.mxu0 0.0
    %1318 = vmatprep.subr.mxu0 0.0
    %1319 = vmatpush2.msra.mxu0 0.0
    %1320 = vmatprep.subr.mxu0 0.0
    %1321 = vmatpush2.msra.mxu0 0.0
    %1322 = vmatprep.subr.mxu0 0.0
    %1323 = vmatpush2.msra.mxu0 0.0
    %1324 = vmatprep.subr.mxu0 0.0
    %1325 = vmatpush2.msra.mxu0 0.0
    %1326 = vmatprep.subr.mxu0 0.0
    %1327 = vmatpush2.msra.mxu0 0.0
    %1328 = vmatprep.mubr.f32.mxu0 0.0
    %1329 = vmatmul.mubr.f32.gmra.mxu0 %v1262
    %v1330 = vpop.f32.mrf.mxu0
    %v1331 = vadd.f32 0.0, %v1330
    %v1332 = vpop.f32.mrf.mxu0
    %1333 = vdwg.mxu0
    %v1335 = vsel %vm183, %v894, 0
    %1337 = vmatprep.subr.mxu0 0.0
    %1338 = vmatpush1.msra.mxu0 0.0
    %1339 = vmatprep.subr.mxu0 0.0
    %1340 = vmatpush1.msra.mxu0 0.0
    %1341 = vmatprep.subr.mxu0 0.0
    %1342 = vmatpush1.msra.mxu0 0.0
    %1343 = vmatprep.subr.mxu0 0.0
    %1344 = vmatpush1.msra.mxu0 0.0
    %1345 = vmatprep.subr.mxu0 0.0
    %1346 = vmatpush1.msra.mxu0 0.0
    %1347 = vmatprep.subr.mxu0 0.0
    %1348 = vmatpush1.msra.mxu0 0.0
    %1349 = vmatprep.subr.mxu0 0.0
    %1350 = vmatpush1.msra.mxu0 0.0
    %1351 = vmatprep.subr.mxu0 0.0
    %1352 = vmatpush1.msra.mxu0 0.0
    %1353 = vmatprep.subr.mxu0 0.0
    %1354 = vmatpush1.msra.mxu0 0.0
    %1355 = vmatprep.subr.mxu0 0.0
    %1356 = vmatpush1.msra.mxu0 0.0
    %1357 = vmatprep.subr.mxu0 0.0
    %1358 = vmatpush1.msra.mxu0 0.0
    %1359 = vmatprep.subr.mxu0 0.0
    %1360 = vmatpush1.msra.mxu0 0.0
    %1361 = vmatprep.subr.mxu0 0.0
    %1362 = vmatpush1.msra.mxu0 0.0
    %1363 = vmatprep.subr.mxu0 0.0
    %1364 = vmatpush1.msra.mxu0 0.0
    %1365 = vmatprep.subr.mxu0 0.0
    %1366 = vmatpush1.msra.mxu0 0.0
    %1367 = vmatprep.subr.mxu0 0.0
    %1368 = vmatpush1.msra.mxu0 %v170
    %1369 = vmatprep.subr.mxu0 0.0
    %1370 = vmatpush2.msra.mxu0 0.0
    %1371 = vmatprep.subr.mxu0 0.0
    %1372 = vmatpush2.msra.mxu0 0.0
    %1373 = vmatprep.subr.mxu0 0.0
    %1374 = vmatpush2.msra.mxu0 0.0
    %1375 = vmatprep.subr.mxu0 0.0
    %1376 = vmatpush2.msra.mxu0 0.0
    %1377 = vmatprep.subr.mxu0 0.0
    %1378 = vmatpush2.msra.mxu0 0.0
    %1379 = vmatprep.subr.mxu0 0.0
    %1380 = vmatpush2.msra.mxu0 0.0
    %1381 = vmatprep.subr.mxu0 0.0
    %1382 = vmatpush2.msra.mxu0 0.0
    %1383 = vmatprep.subr.mxu0 0.0
    %1384 = vmatpush2.msra.mxu0 0.0
    %1385 = vmatprep.subr.mxu0 0.0
    %1386 = vmatpush2.msra.mxu0 0.0
    %1387 = vmatprep.subr.mxu0 0.0
    %1388 = vmatpush2.msra.mxu0 0.0
    %1389 = vmatprep.subr.mxu0 0.0
    %1390 = vmatpush2.msra.mxu0 0.0
    %1391 = vmatprep.subr.mxu0 0.0
    %1392 = vmatpush2.msra.mxu0 0.0
    %1393 = vmatprep.subr.mxu0 0.0
    %1394 = vmatpush2.msra.mxu0 0.0
    %1395 = vmatprep.subr.mxu0 0.0
    %1396 = vmatpush2.msra.mxu0 0.0
    %1397 = vmatprep.subr.mxu0 0.0
    %1398 = vmatpush2.msra.mxu0 0.0
    %1399 = vmatprep.subr.mxu0 0.0
    %1400 = vmatpush2.msra.mxu0 0.0
    %1401 = vmatprep.mubr.f32.mxu0 0.0
    %1402 = vmatmul.mubr.f32.gmra.mxu0 %v1335
    %v1403 = vpop.f32.mrf.mxu0
    %v1404 = vadd.f32 0.0, %v1403
    %v1405 = vpop.f32.mrf.mxu0
    %1406 = vdwg.mxu0
    %v1408 = vsel %vm183, %v895, 0
    %1410 = vmatprep.subr.mxu0 0.0
    %1411 = vmatpush1.msra.mxu0 0.0
    %1412 = vmatprep.subr.mxu0 0.0
    %1413 = vmatpush1.msra.mxu0 0.0
    %1414 = vmatprep.subr.mxu0 0.0
    %1415 = vmatpush1.msra.mxu0 0.0
    %1416 = vmatprep.subr.mxu0 0.0
    %1417 = vmatpush1.msra.mxu0 0.0
    %1418 = vmatprep.subr.mxu0 0.0
    %1419 = vmatpush1.msra.mxu0 0.0
    %1420 = vmatprep.subr.mxu0 0.0
    %1421 = vmatpush1.msra.mxu0 0.0
    %1422 = vmatprep.subr.mxu0 0.0
    %1423 = vmatpush1.msra.mxu0 0.0
    %1424 = vmatprep.subr.mxu0 0.0
    %1425 = vmatpush1.msra.mxu0 0.0
    %1426 = vmatprep.subr.mxu0 0.0
    %1427 = vmatpush1.msra.mxu0 0.0
    %1428 = vmatprep.subr.mxu0 0.0
    %1429 = vmatpush1.msra.mxu0 0.0
    %1430 = vmatprep.subr.mxu0 0.0
    %1431 = vmatpush1.msra.mxu0 0.0
    %1432 = vmatprep.subr.mxu0 0.0
    %1433 = vmatpush1.msra.mxu0 0.0
    %1434 = vmatprep.subr.mxu0 0.0
    %1435 = vmatpush1.msra.mxu0 0.0
    %1436 = vmatprep.subr.mxu0 0.0
    %1437 = vmatpush1.msra.mxu0 0.0
    %1438 = vmatprep.subr.mxu0 0.0
    %1439 = vmatpush1.msra.mxu0 0.0
    %1440 = vmatprep.subr.mxu0 0.0
    %1441 = vmatpush1.msra.mxu0 %v172
    %1442 = vmatprep.subr.mxu0 0.0
    %1443 = vmatpush2.msra.mxu0 0.0
    %1444 = vmatprep.subr.mxu0 0.0
    %1445 = vmatpush2.msra.mxu0 0.0
    %1446 = vmatprep.subr.mxu0 0.0
    %1447 = vmatpush2.msra.mxu0 0.0
    %1448 = vmatprep.subr.mxu0 0.0
    %1449 = vmatpush2.msra.mxu0 0.0
    %1450 = vmatprep.subr.mxu0 0.0
    %1451 = vmatpush2.msra.mxu0 0.0
    %1452 = vmatprep.subr.mxu0 0.0
    %1453 = vmatpush2.msra.mxu0 0.0
    %1454 = vmatprep.subr.mxu0 0.0
    %1455 = vmatpush2.msra.mxu0 0.0
    %1456 = vmatprep.subr.mxu0 0.0
    %1457 = vmatpush2.msra.mxu0 0.0
    %1458 = vmatprep.subr.mxu0 0.0
    %1459 = vmatpush2.msra.mxu0 0.0
    %1460 = vmatprep.subr.mxu0 0.0
    %1461 = vmatpush2.msra.mxu0 0.0
    %1462 = vmatprep.subr.mxu0 0.0
    %1463 = vmatpush2.msra.mxu0 0.0
    %1464 = vmatprep.subr.mxu0 0.0
    %1465 = vmatpush2.msra.mxu0 0.0
    %1466 = vmatprep.subr.mxu0 0.0
    %1467 = vmatpush2.msra.mxu0 0.0
    %1468 = vmatprep.subr.mxu0 0.0
    %1469 = vmatpush2.msra.mxu0 0.0
    %1470 = vmatprep.subr.mxu0 0.0
    %1471 = vmatpush2.msra.mxu0 0.0
    %1472 = vmatprep.subr.mxu0 0.0
    %1473 = vmatpush2.msra.mxu0 0.0
    %1474 = vmatprep.mubr.f32.mxu0 0.0
    %1475 = vmatmul.mubr.f32.gmra.mxu0 %v1408
    %v1476 = vpop.f32.mrf.mxu0
    %v1477 = vadd.f32 0.0, %v1476
    %v1478 = vpop.f32.mrf.mxu0
    %1479 = vdwg.mxu0
    %v1480 = vadd.f32 %v147, %v966
    %v1481 = vadd.f32 %v152, %v1039
    %v1482 = vadd.f32 %v158, %v1112
    %v1483 = vadd.f32 %v160, %v1185
    %v1484 = vadd.f32 %v164, %v1258
    %v1485 = vadd.f32 %v166, %v1331
    %v1486 = vadd.f32 %v170, %v1404
    %v1487 = vadd.f32 %v172, %v1477
    %1490 = vrot.lane.b32.xlu0 %v1482, 8
    %v1491 = vpop.permute.xlu0 %1490
    %1492 = vrot.lane.b32.xlu0 %v1483, 8
    %v1493 = vpop.permute.xlu0 %1492
    %1498 = vrot.lane.b32.xlu0 %v1484, 16
    %v1499 = vpop.permute.xlu0 %1498
    %1500 = vrot.lane.b32.xlu0 %v1485, 16
    %v1501 = vpop.permute.xlu0 %1500
    %1506 = vrot.lane.b32.xlu0 %v1486, 24
    %v1507 = vpop.permute.xlu0 %1506
    %1508 = vrot.lane.b32.xlu0 %v1487, 24
    %v1509 = vpop.permute.xlu0 %1508
    %v1512 = vsel %vm183, %v1480, %v1491
    %v1513 = vsel %vm183, %v1481, %v1493
    %v1514 = vsel %vm73, %v1512, %v1499
    %v1515 = vsel %vm73, %v1513, %v1501
    %vm1516 = vcmask 195584
    %v1517 = vsel %vm1516, %v1514, %v1507
    %v1518 = vsel %vm1516, %v1515, %v1509
    %v1519 = vld [vmem:[#allocation7] sm:$0xff]
    %v1520 = vld [vmem:[#allocation7 + $0x8] sm:$0xff]
    %v1521 = vld [vmem:[#allocation7 + $0x10] sm:$0xff]
    %v1522 = vld [vmem:[#allocation7 + $0x18] sm:$0xff]
    %v1523 = vld [vmem:[%s4] sm:$0x1]
    %v1525 = vlaneseq
    %v1526 = vshrl.u32 %v1525, 7
    %v1527 = vsub.s32 0, %v1526
    %v1528 = vrot.slane %v1523, %v1527
    %vm1530 = vcmask 261120
    %v1532 = vsel %vm1530, %v1517, 0
    %v1535 = vsel %vm1530, %v1518, 0
    %1537 = vmatprep.subr.mxu0 0.0
    %1538 = vmatpush1.msra.mxu0 0.0
    %1539 = vmatprep.subr.mxu0 0.0
    %1540 = vmatpush1.msra.mxu0 0.0
    %1541 = vmatprep.subr.mxu0 0.0
    %1542 = vmatpush1.msra.mxu0 0.0
    %1543 = vmatprep.subr.mxu0 0.0
    %1544 = vmatpush1.msra.mxu0 0.0
    %1545 = vmatprep.subr.mxu0 0.0
    %1546 = vmatpush1.msra.mxu0 0.0
    %1547 = vmatprep.subr.mxu0 0.0
    %1548 = vmatpush1.msra.mxu0 0.0
    %1549 = vmatprep.subr.mxu0 0.0
    %1550 = vmatpush1.msra.mxu0 0.0
    %1551 = vmatprep.subr.mxu0 0.0
    %1552 = vmatpush1.msra.mxu0 0.0
    %1553 = vmatprep.subr.mxu0 0.0
    %1554 = vmatpush1.msra.mxu0 0.0
    %1555 = vmatprep.subr.mxu0 0.0
    %1556 = vmatpush1.msra.mxu0 0.0
    %1557 = vmatprep.subr.mxu0 0.0
    %1558 = vmatpush1.msra.mxu0 0.0
    %1559 = vmatprep.subr.mxu0 0.0
    %1560 = vmatpush1.msra.mxu0 0.0
    %1561 = vmatprep.subr.mxu0 0.0
    %1562 = vmatpush1.msra.mxu0 %v1522
    %1563 = vmatprep.subr.mxu0 0.0
    %1564 = vmatpush1.msra.mxu0 %v1521
    %1565 = vmatprep.subr.mxu0 0.0
    %1566 = vmatpush1.msra.mxu0 %v1520
    %1567 = vmatprep.subr.mxu0 0.0
    %1568 = vmatpush1.msra.mxu0 %v1519
    %1569 = vmatprep.subr.mxu0 0.0
    %1570 = vmatpush2.msra.mxu0 0.0
    %1571 = vmatprep.subr.mxu0 0.0
    %1572 = vmatpush2.msra.mxu0 0.0
    %1573 = vmatprep.subr.mxu0 0.0
    %1574 = vmatpush2.msra.mxu0 0.0
    %1575 = vmatprep.subr.mxu0 0.0
    %1576 = vmatpush2.msra.mxu0 0.0
    %1577 = vmatprep.subr.mxu0 0.0
    %1578 = vmatpush2.msra.mxu0 0.0
    %1579 = vmatprep.subr.mxu0 0.0
    %1580 = vmatpush2.msra.mxu0 0.0
    %1581 = vmatprep.subr.mxu0 0.0
    %1582 = vmatpush2.msra.mxu0 0.0
    %1583 = vmatprep.subr.mxu0 0.0
    %1584 = vmatpush2.msra.mxu0 0.0
    %1585 = vmatprep.subr.mxu0 0.0
    %1586 = vmatpush2.msra.mxu0 0.0
    %1587 = vmatprep.subr.mxu0 0.0
    %1588 = vmatpush2.msra.mxu0 0.0
    %1589 = vmatprep.subr.mxu0 0.0
    %1590 = vmatpush2.msra.mxu0 0.0
    %1591 = vmatprep.subr.mxu0 0.0
    %1592 = vmatpush2.msra.mxu0 0.0
    %1593 = vmatprep.subr.mxu0 0.0
    %1594 = vmatpush2.msra.mxu0 0.0
    %1595 = vmatprep.subr.mxu0 0.0
    %1596 = vmatpush2.msra.mxu0 0.0
    %1597 = vmatprep.subr.mxu0 0.0
    %1598 = vmatpush2.msra.mxu0 0.0
    %1599 = vmatprep.subr.mxu0 0.0
    %1600 = vmatpush2.msra.mxu0 0.0
    %1601 = vmatprep.mubr.f32.mxu0 0.0
    %1602 = vmatmul.mubr.f32.gmra.mxu0 %v1532
    %v1603 = vpop.f32.mrf.mxu0
    %v1604 = vadd.f32 %v1528, %v1603
    %v1605 = vpop.f32.mrf.mxu0
    %1606 = vmatprep.mubr.f32.mxu0 0.0
    %1607 = vmatmul.mubr.f32.gmra.mxu0 %v1535
    %v1608 = vpop.f32.mrf.mxu0
    %v1609 = vadd.f32 %v1528, %v1608
    %v1610 = vpop.f32.mrf.mxu0
    %1611 = vdwg.mxu0
    %v1612 = vmax.f32 %v1604, 0.0
    %v1613 = vmax.f32 %v1609, 0.0
    %v1614 = vadd.f32 %v1517, %v1612
    %v1615 = vadd.f32 %v1518, %v1613
    %1616 = vst.msk [vmem:[#allocation8] sm:$0xff] %vm1530, %v1614
    %1617 = vst.msk [vmem:[#allocation8 + $0x8] sm:$0xff] %vm1530, %v1615
    // Predicated region
    $region34: #{tpu_custom_call.1} parent=1 // pred_check
      _
    $region35: #{tpu_custom_call.1} parent=1 // pred_check_branch
      %1619 = sbr.rel (0) target = $region37
    $region36: #{tpu_custom_call.1} parent=1 // pred_region
      %s1621 = ssub.s32 256, 256
      %1622 = vsyncadd [#allocation4], %s1621
      %s1623 = sshll.u32 [#allocation8], 4
      %s1624 = int_to_ptr.vmem [resolvable:$true] %s1623
      %1629 = dma.vmem_to_hbm [thread:$0]  %s1624, 256, %s5, [#allocation4], 128, 128, 8
    $region37: #{tpu_custom_call.1} parent=1 // pred_fallthru
      _
    // Predicated region
    $region38: #{tpu_custom_call.1} parent=1 // pred_check
      _
    $region39: #{tpu_custom_call.1} parent=1 // pred_check_branch
      %1631 = sbr.rel (0) target = $region41
    $region40: #{tpu_custom_call.1} parent=1 // pred_region
      %1632 = dma.done [#allocation4], 256
    $region41: #{tpu_custom_call.1} parent=1 // pred_fallthru
      _
    %1633 = vsyncpa [#allocation3], 1
    %1634 = vsyncpa [#allocation6], 1
    %1635 = vsyncpa [#allocation4], 1

</llo_original>
